<compile_context>
chip_gen: v5e
topology: v5e:2x2
jax: 0.10.0
libtpu: 0.0.40
codegen_flags: <defaults>
</compile_context>

<pallas_src>
import functools
import math

import jax
import jax.numpy as jnp
from jax.experimental import pallas as pl
from jax.experimental.pallas import tpu as pltpu


def _sdpa_kernel(q_ref, k_ref, v_ref, mask_ref, ctx_ref, attn_ref, *,
                 sm_scale, k_chunk):
    # q_ref    : (block_q, d_k)    native dtype
    # k_ref    : (len_k,  d_k)     resident for this (batch, head)
    # v_ref    : (len_k,  d_v)
    # mask_ref : (block_q, len_k)  int8, nonzero == masked
    # ctx_ref  : (block_q, d_v)
    # attn_ref : (block_q, len_k)
    len_k = k_ref.shape[0]
    block_q = q_ref.shape[0]
    n_chunks = len_k // k_chunk

    # Fold 1/sqrt(d_k) into Q: block_q*d_k VPU multiplies instead of block_q*Lk.
    q = q_ref[...] * jnp.asarray(sm_scale, dtype=q_ref.dtype)

    def masked_scores(c):
        # Static chunk offsets -> ref slices are free views, aligned loads/stores.
        lo = c * k_chunk
        k_c = k_ref[lo:lo + k_chunk, :]
        s = jax.lax.dot_general(q, k_c, (((1,), (1,)), ((), ())),
                                preferred_element_type=jnp.float32)
        m_c = mask_ref[:, lo:lo + k_chunk]
        return jnp.where(m_c != 0, jnp.float32(-1.0e9), s)

    # ---- Pass 1: per-row running max and softmax denominator ----------------
    # Bounds live f32 temporaries to (block_q, k_chunk) per iteration.
    m_i = jnp.full((block_q, 1), -jnp.inf, dtype=jnp.float32)
    l_i = jnp.zeros((block_q, 1), dtype=jnp.float32)
    # TODO(synk): for very large len_k / chunk counts switch this short static
    # loop to lax.fori_loop (or a grid reduction axis) to bound code size.
    for c in range(n_chunks):
        s = masked_scores(c)
        m_new = jnp.maximum(m_i, jnp.max(s, axis=-1, keepdims=True))
        l_i = l_i * jnp.exp(m_i - m_new) + jnp.sum(
            jnp.exp(s - m_new), axis=-1, keepdims=True)
        m_i = m_new

    # EUP approximate reciprocal: the divide leaves the VPU path.
    inv_l = pl.reciprocal(l_i, approx=True)

    # ---- Pass 2: write attn chunks, accumulate context on the MXU -----------
    acc = jnp.zeros((block_q, v_ref.shape[1]), dtype=jnp.float32)
    for c in range(n_chunks):
        lo = c * k_chunk
        p = jnp.exp(masked_scores(c) - m_i) * inv_l
        attn_ref[:, lo:lo + k_chunk] = p.astype(attn_ref.dtype)
        acc = acc + jnp.dot(p.astype(v_ref.dtype), v_ref[lo:lo + k_chunk, :],
                            preferred_element_type=jnp.float32)
    ctx_ref[...] = acc.astype(ctx_ref.dtype)


def scaled_dot_product_attention(Q, K, V, attn_mask, *, block_q=256,
                                 k_chunk=512, attn_dtype=None):
    """Q: [B,H,Lq,d_k], K: [B,H,Lk,d_k], V: [B,H,Lk,d_v],
    attn_mask: [B,H,Lq,Lk] (True/nonzero == masked).
    Returns (context [B,H,Lq,d_v], attn [B,H,Lq,Lk])."""
    B, H, Lq, dk = Q.shape
    _, _, Lk, dk2 = K.shape
    _, _, Lv, dv = V.shape
    assert dk == dk2 and Lv == Lk
    assert attn_mask.shape == (B, H, Lq, Lk)

    block_q = min(block_q, Lq)
    k_chunk = min(k_chunk, Lk)
    assert Lq % block_q == 0, "len_q must be divisible by block_q"
    assert Lk % k_chunk == 0, "len_k must be divisible by k_chunk"

    attn_dtype = Q.dtype if attn_dtype is None else jnp.dtype(attn_dtype)

    # int8 mask: 4x less HBM traffic than the old int32 materialization.
    mask_i8 = attn_mask.astype(jnp.int8)

    # Fold (B, H) into one grid axis: cheap leading-dim reshape, balanced
    # sharding across v7x's two TensorCores, simpler index maps.
    BH = B * H
    Qf = Q.reshape(BH, Lq, dk)
    Kf = K.reshape(BH, Lk, dk)
    Vf = V.reshape(BH, Lk, dv)
    Mf = mask_i8.reshape(BH, Lq, Lk)

    sm_scale = 1.0 / math.sqrt(dk)
    kernel = functools.partial(_sdpa_kernel, sm_scale=sm_scale, k_chunk=k_chunk)

    grid = (BH, Lq // block_q)

    isz = lambda dt: jnp.dtype(dt).itemsize
    # VMEM budget: double-buffered pipeline copies of every operand + outputs,
    # plus headroom for the (block_q, k_chunk) f32 temporaries.
    vmem_bytes = 2 * (
        Lk * dk * isz(K.dtype) + Lk * dv * isz(V.dtype)     # resident K, V
        + block_q * dk * isz(Q.dtype)                       # Q tile
        + block_q * Lk                                      # int8 mask tile
        + block_q * Lk * isz(attn_dtype)                    # attn tile
        + block_q * dv * isz(Q.dtype)                       # ctx tile
    ) + 4 * block_q * k_chunk * 4
    vmem_limit = int(min(128 * 1024 * 1024,
                         max(32 * 1024 * 1024, 2 * vmem_bytes)))

    cost = pl.CostEstimate(
        flops=2 * BH * Lq * Lk * (2 * dk + dv),   # QK^T twice (2-pass) + attn@V
        transcendentals=2 * BH * Lq * Lk,         # exp in both passes
        bytes_accessed=(Qf.nbytes + Kf.nbytes + Vf.nbytes + Mf.nbytes
                        + BH * Lq * dv * isz(Q.dtype)
                        + BH * Lq * Lk * isz(attn_dtype)),
    )

    ctx, attn = pl.pallas_call(
        kernel,
        out_shape=(
            jax.ShapeDtypeStruct((BH, Lq, dv), Q.dtype),     # context
            jax.ShapeDtypeStruct((BH, Lq, Lk), attn_dtype),  # attn
        ),
        grid=grid,
        in_specs=[
            # Q tile for this q-block (batch*head dim squeezed).
            pl.BlockSpec((None, block_q, dk), lambda b, i: (b, i, 0)),
            # Full K / V for this (batch, head): block index is constant across
            # the inner q axis, so the pipeline only re-DMAs them per head.
            pl.BlockSpec((None, Lk, dk), lambda b, i: (b, 0, 0)),
            pl.BlockSpec((None, Lk, dv), lambda b, i: (b, 0, 0)),
            # int8 mask tile matching the score tile.
            pl.BlockSpec((None, block_q, Lk), lambda b, i: (b, i, 0)),
        ],
        out_specs=(
            pl.BlockSpec((None, block_q, dv), lambda b, i: (b, i, 0)),
            pl.BlockSpec((None, block_q, Lk), lambda b, i: (b, i, 0)),
        ),
        compiler_params=pltpu.CompilerParams(
            dimension_semantics=("parallel", "parallel"),
            vmem_limit_bytes=vmem_limit),
        cost_estimate=cost,
    )(Qf, Kf, Vf, Mf)

    return ctx.reshape(B, H, Lq, dv), attn.reshape(B, H, Lq, Lk)


def _reference(Q, K, V, attn_mask):
    """Pure-JAX replica of the PyTorch forward."""
    dk = Q.shape[-1]
    scores = jnp.einsum("bhqd,bhkd->bhqk", Q, K,
                        precision=jax.lax.Precision.HIGHEST) / math.sqrt(dk)
    scores = jnp.where(attn_mask, jnp.float32(-1.0e9), scores)
    attn = jax.nn.softmax(scores, axis=-1)
    ctx = jnp.einsum("bhqk,bhkd->bhqd", attn, V,
                     precision=jax.lax.Precision.HIGHEST)
    return ctx, attn


if __name__ == "__main__":
    # Small shapes consistent with the module (d_k = d_v = 64); Lq/Lk chosen so
    # that both the q-block grid axis and the inner K-chunk loop are exercised.
    B, H, Lq, Lk = 2, 2, 256, 256
    d_k = d_v = 64

    key = jax.random.PRNGKey(0)
    kq, kk, kv = jax.random.split(key, 3)
    Q = jax.random.normal(kq, (B, H, Lq, d_k), dtype=jnp.float32)
    K = jax.random.normal(kk, (B, H, Lk, d_k), dtype=jnp.float32)
    V = jax.random.normal(kv, (B, H, Lk, d_v), dtype=jnp.float32)
    # Causal mask (True == masked), broadcast to [B, H, Lq, Lk].
    causal = jnp.triu(jnp.ones((Lq, Lk), dtype=jnp.bool_), k=1)
    attn_mask = jnp.broadcast_to(causal, (B, H, Lq, Lk))

    ctx, attn = scaled_dot_product_attention(Q, K, V, attn_mask,
                                             block_q=128, k_chunk=128)
    ctx = jax.block_until_ready(ctx)
    attn = jax.block_until_ready(attn)

    ref_ctx, ref_attn = _reference(Q, K, V, attn_mask)
    assert ctx.shape == (B, H, Lq, d_v) and ctx.dtype == Q.dtype
    assert attn.shape == (B, H, Lq, Lk) and attn.dtype == Q.dtype
    assert jnp.allclose(attn, ref_attn, atol=3e-3, rtol=3e-3), "attn mismatch"
    assert jnp.allclose(ctx, ref_ctx, atol=3e-3, rtol=3e-3), "context mismatch"
    print("KERNEL_OK")
</pallas_src>

<mosaic_0001>
module attributes {stable_mosaic.version = 11 : i64} {
  func.func @_sdpa_kernel(%arg0: i32, %arg1: i32, %arg2: memref<1x128x64xf32, #tpu.memory_space<vmem>>, %arg3: memref<1x256x64xf32, #tpu.memory_space<vmem>>, %arg4: memref<1x256x64xf32, #tpu.memory_space<vmem>>, %arg5: memref<1x128x256xi8, #tpu.memory_space<vmem>>, %arg6: memref<1x128x64xf32, #tpu.memory_space<vmem>>, %arg7: memref<1x128x256xf32, #tpu.memory_space<vmem>>) attributes {dimension_semantics = [#tpu.dimension_semantics<parallel>, #tpu.dimension_semantics<parallel>], iteration_bounds = array<i64: 4, 2>, scalar_prefetch = 0 : i64, scratch_operands = 0 : i64, tpu.core_type = #tpu.core_type<tc>, window_params = [{transform_indices = @transform_0, window_bounds = array<i64: 1, 128, 64>}, {transform_indices = @transform_1, window_bounds = array<i64: 1, 256, 64>}, {transform_indices = @transform_2, window_bounds = array<i64: 1, 256, 64>}, {transform_indices = @transform_3, window_bounds = array<i64: 1, 128, 256>}, {transform_indices = @transform_4, window_bounds = array<i64: 1, 128, 64>}, {transform_indices = @transform_5, window_bounds = array<i64: 1, 128, 256>}]} {
    %c0 = arith.constant 0 : index
    %c0_0 = arith.constant 0 : index
    %c0_1 = arith.constant 0 : index
    %0 = vector.load %arg2[%c0, %c0_0, %c0_1] : memref<1x128x64xf32, #tpu.memory_space<vmem>>, vector<1x128x64xf32>
    %1 = vector.shape_cast %0 : vector<1x128x64xf32> to vector<128x64xf32>
    %cst = arith.constant 1.250000e-01 : f32
    %2 = vector.broadcast %cst : f32 to vector<128x64xf32>
    %3 = arith.mulf %1, %2 : vector<128x64xf32>
    %cst_2 = arith.constant 0xFF800000 : f32
    %4 = vector.broadcast %cst_2 : f32 to vector<128x1xf32>
    %cst_3 = arith.constant 0.000000e+00 : f32
    %5 = vector.broadcast %cst_3 : f32 to vector<128x1xf32>
    %c0_4 = arith.constant 0 : index
    %c0_5 = arith.constant 0 : index
    %c0_6 = arith.constant 0 : index
    %6 = vector.load %arg3[%c0_4, %c0_5, %c0_6] : memref<1x256x64xf32, #tpu.memory_space<vmem>>, vector<1x128x64xf32>
    %7 = vector.shape_cast %6 : vector<1x128x64xf32> to vector<128x64xf32>
    %cst_7 = arith.constant dense<0.000000e+00> : vector<128x128xf32>
    %8 = tpu.matmul %3, %7, %cst_7 {dimension_numbers = #tpu.dot_dimension_numbers<[1], [1], [0], [0], [0, 0, 1, 0], [], []>} : vector<128x64xf32>, vector<128x64xf32>, vector<128x128xf32> -> vector<128x128xf32>
    %c0_8 = arith.constant 0 : index
    %c0_9 = arith.constant 0 : index
    %c0_10 = arith.constant 0 : index
    %9 = vector.load %arg5[%c0_8, %c0_9, %c0_10] : memref<1x128x256xi8, #tpu.memory_space<vmem>>, vector<1x128x128xi8>
    %10 = vector.shape_cast %9 : vector<1x128x128xi8> to vector<128x128xi8>
    %c0_i8 = arith.constant 0 : i8
    %11 = vector.broadcast %c0_i8 : i8 to vector<128x128xi8>
    %12 = arith.cmpi ne, %10, %11 : vector<128x128xi8>
    %cst_11 = arith.constant -1.000000e+09 : f32
    %13 = vector.broadcast %cst_11 : f32 to vector<128x128xf32>
    %14 = arith.select %12, %13, %8 : vector<128x128xi1>, vector<128x128xf32>
    %cst_12 = arith.constant dense<0xFF800000> : vector<128xf32>
    %15 = vector.multi_reduction <maximumf>, %14, %cst_12 [1] : vector<128x128xf32> to vector<128xf32>
    %16 = vector.shape_cast %15 : vector<128xf32> to vector<128x1xf32>
    %17 = arith.maximumf %4, %16 : vector<128x1xf32>
    %18 = arith.subf %4, %17 : vector<128x1xf32>
    %19 = math.exp %18 : vector<128x1xf32>
    %20 = arith.mulf %5, %19 : vector<128x1xf32>
    %21 = vector.broadcast %17 : vector<128x1xf32> to vector<128x128xf32>
    %22 = arith.subf %14, %21 : vector<128x128xf32>
    %23 = math.exp %22 : vector<128x128xf32>
    %cst_13 = arith.constant dense<0.000000e+00> : vector<128xf32>
    %24 = vector.multi_reduction <add>, %23, %cst_13 [1] : vector<128x128xf32> to vector<128xf32>
    %25 = vector.shape_cast %24 : vector<128xf32> to vector<128x1xf32>
    %26 = arith.addf %20, %25 : vector<128x1xf32>
    %c0_14 = arith.constant 0 : index
    %c128 = arith.constant 128 : index
    %c0_15 = arith.constant 0 : index
    %27 = vector.load %arg3[%c0_14, %c128, %c0_15] : memref<1x256x64xf32, #tpu.memory_space<vmem>>, vector<1x128x64xf32>
    %28 = vector.shape_cast %27 : vector<1x128x64xf32> to vector<128x64xf32>
    %cst_16 = arith.constant dense<0.000000e+00> : vector<128x128xf32>
    %29 = tpu.matmul %3, %28, %cst_16 {dimension_numbers = #tpu.dot_dimension_numbers<[1], [1], [0], [0], [0, 0, 1, 0], [], []>} : vector<128x64xf32>, vector<128x64xf32>, vector<128x128xf32> -> vector<128x128xf32>
    %c0_17 = arith.constant 0 : index
    %c0_18 = arith.constant 0 : index
    %c128_19 = arith.constant 128 : index
    %30 = vector.load %arg5[%c0_17, %c0_18, %c128_19] : memref<1x128x256xi8, #tpu.memory_space<vmem>>, vector<1x128x128xi8>
    %31 = vector.shape_cast %30 : vector<1x128x128xi8> to vector<128x128xi8>
    %c0_i8_20 = arith.constant 0 : i8
    %32 = vector.broadcast %c0_i8_20 : i8 to vector<128x128xi8>
    %33 = arith.cmpi ne, %31, %32 : vector<128x128xi8>
    %cst_21 = arith.constant -1.000000e+09 : f32
    %34 = vector.broadcast %cst_21 : f32 to vector<128x128xf32>
    %35 = arith.select %33, %34, %29 : vector<128x128xi1>, vector<128x128xf32>
    %cst_22 = arith.constant dense<0xFF800000> : vector<128xf32>
    %36 = vector.multi_reduction <maximumf>, %35, %cst_22 [1] : vector<128x128xf32> to vector<128xf32>
    %37 = vector.shape_cast %36 : vector<128xf32> to vector<128x1xf32>
    %38 = arith.maximumf %17, %37 : vector<128x1xf32>
    %39 = arith.subf %17, %38 : vector<128x1xf32>
    %40 = math.exp %39 : vector<128x1xf32>
    %41 = arith.mulf %26, %40 : vector<128x1xf32>
    %42 = vector.broadcast %38 : vector<128x1xf32> to vector<128x128xf32>
    %43 = arith.subf %35, %42 : vector<128x128xf32>
    %44 = math.exp %43 : vector<128x128xf32>
    %cst_23 = arith.constant dense<0.000000e+00> : vector<128xf32>
    %45 = vector.multi_reduction <add>, %44, %cst_23 [1] : vector<128x128xf32> to vector<128xf32>
    %46 = vector.shape_cast %45 : vector<128xf32> to vector<128x1xf32>
    %47 = arith.addf %41, %46 : vector<128x1xf32>
    %48 = tpu.reciprocal %47 {approx = true} : vector<128x1xf32> -> vector<128x1xf32>
    %cst_24 = arith.constant 0.000000e+00 : f32
    %49 = vector.broadcast %cst_24 : f32 to vector<128x64xf32>
    %c0_25 = arith.constant 0 : index
    %c0_26 = arith.constant 0 : index
    %c0_27 = arith.constant 0 : index
    %50 = vector.load %arg3[%c0_25, %c0_26, %c0_27] : memref<1x256x64xf32, #tpu.memory_space<vmem>>, vector<1x128x64xf32>
    %51 = vector.shape_cast %50 : vector<1x128x64xf32> to vector<128x64xf32>
    %cst_28 = arith.constant dense<0.000000e+00> : vector<128x128xf32>
    %52 = tpu.matmul %3, %51, %cst_28 {dimension_numbers = #tpu.dot_dimension_numbers<[1], [1], [0], [0], [0, 0, 1, 0], [], []>} : vector<128x64xf32>, vector<128x64xf32>, vector<128x128xf32> -> vector<128x128xf32>
    %c0_29 = arith.constant 0 : index
    %c0_30 = arith.constant 0 : index
    %c0_31 = arith.constant 0 : index
    %53 = vector.load %arg5[%c0_29, %c0_30, %c0_31] : memref<1x128x256xi8, #tpu.memory_space<vmem>>, vector<1x128x128xi8>
    %54 = vector.shape_cast %53 : vector<1x128x128xi8> to vector<128x128xi8>
    %c0_i8_32 = arith.constant 0 : i8
    %55 = vector.broadcast %c0_i8_32 : i8 to vector<128x128xi8>
    %56 = arith.cmpi ne, %54, %55 : vector<128x128xi8>
    %cst_33 = arith.constant -1.000000e+09 : f32
    %57 = vector.broadcast %cst_33 : f32 to vector<128x128xf32>
    %58 = arith.select %56, %57, %52 : vector<128x128xi1>, vector<128x128xf32>
    %59 = vector.broadcast %38 : vector<128x1xf32> to vector<128x128xf32>
    %60 = arith.subf %58, %59 : vector<128x128xf32>
    %61 = math.exp %60 : vector<128x128xf32>
    %62 = vector.broadcast %48 : vector<128x1xf32> to vector<128x128xf32>
    %63 = arith.mulf %61, %62 : vector<128x128xf32>
    %c0_34 = arith.constant 0 : index
    %c0_35 = arith.constant 0 : index
    %c0_36 = arith.constant 0 : index
    %64 = vector.load %arg7[%c0_34, %c0_35, %c0_36] : memref<1x128x256xf32, #tpu.memory_space<vmem>>, vector<1x128x128xf32>
    %65 = vector.shape_cast %64 : vector<1x128x128xf32> to vector<128x128xf32>
    %66 = vector.shape_cast %63 : vector<128x128xf32> to vector<1x128x128xf32>
    tpu.vector_store %arg7[%c0_34, %c0_35, %c0_36], %66 {strides = array<i32>} : memref<1x128x256xf32, #tpu.memory_space<vmem>>, vector<1x128x128xf32>,
    %c0_37 = arith.constant 0 : index
    %c0_38 = arith.constant 0 : index
    %c0_39 = arith.constant 0 : index
    %67 = vector.load %arg4[%c0_37, %c0_38, %c0_39] : memref<1x256x64xf32, #tpu.memory_space<vmem>>, vector<1x128x64xf32>
    %68 = vector.shape_cast %67 : vector<1x128x64xf32> to vector<128x64xf32>
    %cst_40 = arith.constant dense<0.000000e+00> : vector<128x64xf32>
    %69 = tpu.matmul %63, %68, %cst_40 {dimension_numbers = #tpu.dot_dimension_numbers<[1], [0], [0], [1], [0, 0, 1, 1], [], []>} : vector<128x128xf32>, vector<128x64xf32>, vector<128x64xf32> -> vector<128x64xf32>
    %70 = arith.addf %49, %69 : vector<128x64xf32>
    %c0_41 = arith.constant 0 : index
    %c128_42 = arith.constant 128 : index
    %c0_43 = arith.constant 0 : index
    %71 = vector.load %arg3[%c0_41, %c128_42, %c0_43] : memref<1x256x64xf32, #tpu.memory_space<vmem>>, vector<1x128x64xf32>
    %72 = vector.shape_cast %71 : vector<1x128x64xf32> to vector<128x64xf32>
    %cst_44 = arith.constant dense<0.000000e+00> : vector<128x128xf32>
    %73 = tpu.matmul %3, %72, %cst_44 {dimension_numbers = #tpu.dot_dimension_numbers<[1], [1], [0], [0], [0, 0, 1, 0], [], []>} : vector<128x64xf32>, vector<128x64xf32>, vector<128x128xf32> -> vector<128x128xf32>
    %c0_45 = arith.constant 0 : index
    %c0_46 = arith.constant 0 : index
    %c128_47 = arith.constant 128 : index
    %74 = vector.load %arg5[%c0_45, %c0_46, %c128_47] : memref<1x128x256xi8, #tpu.memory_space<vmem>>, vector<1x128x128xi8>
    %75 = vector.shape_cast %74 : vector<1x128x128xi8> to vector<128x128xi8>
    %c0_i8_48 = arith.constant 0 : i8
    %76 = vector.broadcast %c0_i8_48 : i8 to vector<128x128xi8>
    %77 = arith.cmpi ne, %75, %76 : vector<128x128xi8>
    %cst_49 = arith.constant -1.000000e+09 : f32
    %78 = vector.broadcast %cst_49 : f32 to vector<128x128xf32>
    %79 = arith.select %77, %78, %73 : vector<128x128xi1>, vector<128x128xf32>
    %80 = vector.broadcast %38 : vector<128x1xf32> to vector<128x128xf32>
    %81 = arith.subf %79, %80 : vector<128x128xf32>
    %82 = math.exp %81 : vector<128x128xf32>
    %83 = vector.broadcast %48 : vector<128x1xf32> to vector<128x128xf32>
    %84 = arith.mulf %82, %83 : vector<128x128xf32>
    %c0_50 = arith.constant 0 : index
    %c0_51 = arith.constant 0 : index
    %c128_52 = arith.constant 128 : index
    %85 = vector.load %arg7[%c0_50, %c0_51, %c128_52] : memref<1x128x256xf32, #tpu.memory_space<vmem>>, vector<1x128x128xf32>
    %86 = vector.shape_cast %85 : vector<1x128x128xf32> to vector<128x128xf32>
    %87 = vector.shape_cast %84 : vector<128x128xf32> to vector<1x128x128xf32>
    tpu.vector_store %arg7[%c0_50, %c0_51, %c128_52], %87 {strides = array<i32>} : memref<1x128x256xf32, #tpu.memory_space<vmem>>, vector<1x128x128xf32>,
    %c0_53 = arith.constant 0 : index
    %c128_54 = arith.constant 128 : index
    %c0_55 = arith.constant 0 : index
    %88 = vector.load %arg4[%c0_53, %c128_54, %c0_55] : memref<1x256x64xf32, #tpu.memory_space<vmem>>, vector<1x128x64xf32>
    %89 = vector.shape_cast %88 : vector<1x128x64xf32> to vector<128x64xf32>
    %cst_56 = arith.constant dense<0.000000e+00> : vector<128x64xf32>
    %90 = tpu.matmul %84, %89, %cst_56 {dimension_numbers = #tpu.dot_dimension_numbers<[1], [0], [0], [1], [0, 0, 1, 1], [], []>} : vector<128x128xf32>, vector<128x64xf32>, vector<128x64xf32> -> vector<128x64xf32>
    %91 = arith.addf %70, %90 : vector<128x64xf32>
    %c0_57 = arith.constant 0 : index
    %c0_58 = arith.constant 0 : index
    %c0_59 = arith.constant 0 : index
    %92 = vector.load %arg6[%c0_57, %c0_58, %c0_59] : memref<1x128x64xf32, #tpu.memory_space<vmem>>, vector<1x128x64xf32>
    %93 = vector.shape_cast %92 : vector<1x128x64xf32> to vector<128x64xf32>
    %94 = vector.shape_cast %91 : vector<128x64xf32> to vector<1x128x64xf32>
    tpu.vector_store %arg6[%c0_57, %c0_58, %c0_59], %94 {strides = array<i32>} : memref<1x128x64xf32, #tpu.memory_space<vmem>>, vector<1x128x64xf32>,
    return
  }
  func.func @transform_0(%arg0: i32, %arg1: i32) -> (i32, i32, i32) {
    %c0_i32 = arith.constant 0 : i32
    %c0_i32_0 = arith.constant 0 : i32
    return %arg0, %arg1, %c0_i32 : i32, i32, i32
  }
  func.func @transform_1(%arg0: i32, %arg1: i32) -> (i32, i32, i32) {
    %c0_i32 = arith.constant 0 : i32
    %c0_i32_0 = arith.constant 0 : i32
    %c0_i32_1 = arith.constant 0 : i32
    return %arg0, %c0_i32, %c0_i32_0 : i32, i32, i32
  }
  func.func @transform_2(%arg0: i32, %arg1: i32) -> (i32, i32, i32) {
    %c0_i32 = arith.constant 0 : i32
    %c0_i32_0 = arith.constant 0 : i32
    %c0_i32_1 = arith.constant 0 : i32
    return %arg0, %c0_i32, %c0_i32_0 : i32, i32, i32
  }
  func.func @transform_3(%arg0: i32, %arg1: i32) -> (i32, i32, i32) {
    %c0_i32 = arith.constant 0 : i32
    %c0_i32_0 = arith.constant 0 : i32
    return %arg0, %arg1, %c0_i32 : i32, i32, i32
  }
  func.func @transform_4(%arg0: i32, %arg1: i32) -> (i32, i32, i32) {
    %c0_i32 = arith.constant 0 : i32
    %c0_i32_0 = arith.constant 0 : i32
    return %arg0, %arg1, %c0_i32 : i32, i32, i32
  }
  func.func @transform_5(%arg0: i32, %arg1: i32) -> (i32, i32, i32) {
    %c0_i32 = arith.constant 0 : i32
    %c0_i32_0 = arith.constant 0 : i32
    return %arg0, %arg1, %c0_i32 : i32, i32, i32
  }
}

</mosaic_0001>

<llo_original>
// kernel: tpu_custom_call.1
$region0: #{tpu_custom_call.1}
  #allocation0 [shape = 'u32[]', space=smem, size = 0x4, offset = 0x4, fixed_abs, tag = 'smem constant byte address 0x4 - core index']
  #allocation1 [shape = 'u32[72,128]{1,0:T(1,128)}', space=vmem, size = 0x9000, scoped, tag = 'internal scratch']
  %s0 = inlined_call_operand.vmem [shape: f32[4,256,64], index: 0, kind: input, shape index: {}]
  %s1 = inlined_call_operand.vmem [shape: f32[4,256,64], index: 1, kind: input, shape index: {}]
  %s2 = inlined_call_operand.vmem [shape: f32[4,256,64], index: 2, kind: input, shape index: {}]
  %s3 = inlined_call_operand.vmem [shape: s8[4,256,256], index: 3, kind: input, shape index: {}]
  %s4 = inlined_call_operand.vmem [shape: f32[4,256,64], index: 4, kind: output, shape index: {0}]
  %s5 = inlined_call_operand.hbm [shape: f32[4,256,256], index: 5, kind: output, shape index: {1}]
  %6 = xla_tuple %s4, %s5
  %s7 = sld [smem:[#allocation0]]
  $region57: #{tpu_custom_call.1} parent=0
    _
  %s9 = ssub.s32 1, %s7
  %s10 = scalar_select 0, %s9, %s7
  $region1: #{tpu_custom_call.1} parent=0
    #allocation2 [shape = 'u8[262144]{0}', space=vmem, size = 0x40000, scoped, tag = 'output window, operand 1']
    #allocation3 [shape = 's32[2]{0}', space=sflag, size = 0x8, scoped, tag = 'scoped memory for tpu_custom_call.1']
    %11 = vsyncpa [#allocation3], 0
    %s12 = scalar_lea.sflag [#allocation3], 1
    %13 = vsyncpa %s12, 0
    loop: start=0, step=1, limit=10
    $region2: #{tpu_custom_call.1} parent=1 // loop_pre_header
      _
    $region3: #{tpu_custom_call.1} parent=1 // loop_header
      %s15 = sphi 0, %s19
      %p16 = scmp.ge.s32.totalorder %s15, 10
      %s22 = sphi 0, %s34
      %s23 = sphi 0, %s30
      %s24 = sphi 0, %s22
      %s25 = sphi 0, %s23
      %s26 = sphi 0, %s24
      %s27 = sphi 0, %s25
      %s39 = sphi 0, %s41
      %s42 = sphi 0, %s39
      %s43 = sphi 0, %s42
      %s59 = sphi 0, %s43
      %s65 = sphi 0, %s67
      %s68 = sphi 0, %s65
      %s69 = sphi 0, %s68
      %s85 = sphi 0, %s69
      %s91 = sphi 0, %s93
      %s94 = sphi 0, %s91
      %s95 = sphi 0, %s94
      %s111 = sphi 0, %s95
      %s119 = sphi 0, %s121
      %s122 = sphi 0, %s119
      %s123 = sphi 0, %s122
      %s139 = sphi 0, %s123
      %s147 = sphi 0, %s149
      %s150 = sphi 0, %s147
      %s151 = sphi 0, %s150
      %s167 = sphi 0, %s151
      %s175 = sphi 0, %s177
      %s178 = sphi 0, %s175
      %s179 = sphi 0, %s178
      %s195 = sphi 0, %s179
    $region4: #{tpu_custom_call.1} parent=1 // loop_header_branch
      %18 = sbr.rel (%p16) target = $region8
    $region5: #{tpu_custom_call.1} parent=1 // loop_body
      %s20 = ssub.s32 %s15, 1
      %s21 = ssub.s32 %s15, 2
      %s28 = sadd.s32 1, %s23
      %p29 = scmp.ge.s32.totalorder %s28, 2
      %s30 = scalar_select %p29, 0, %s28
      %s31 = sadd.s32 1, %s22
      %s32 = scalar_select %p29, %s31, %s22
      %p33 = scmp.ge.s32.totalorder %s32, 4
      %s34 = scalar_select %p33, 0, %s32
      %s35 = ssub.s32 %s22, %s34
      %s36 = ssub.s32 %s23, %s30
      %s37 = sor.u32 %s35, %s36
      %p38 = scmp.eq.s32.totalorder %s37, 0
      %s40 = sadd.s32 %s39, 1
      %s41 = scalar_select %p38, %s39, %s40
      %p44 = pneg %p38
      %p45 = scmp.eq.s32.totalorder %s15, 7
      %p46 = por %p44, %p45
      %p47 = scmp.ne.s32.totalorder %s39, %s42
      %p48 = scmp.eq.s32.totalorder %s15, 0
      %p49 = por %p47, %p48
      %p50 = scmp.ne.s32.totalorder %s39, %s42
      %p51 = scmp.eq.s32.totalorder %s20, 7
      %p52 = por %p50, %p51
      %p53 = scmp.ne.s32.totalorder %s42, %s43
      %p54 = scmp.eq.s32.totalorder %s20, 0
      %p55 = por %p53, %p54
      %p56 = scmp.ne.s32.totalorder %s42, %s43
      %p57 = scmp.eq.s32.totalorder %s21, 7
      %p58 = por %p56, %p57
      %p60 = scmp.ne.s32.totalorder %s43, %s59
      %p61 = scmp.eq.s32.totalorder %s21, 0
      %p62 = por %p60, %p61
      %s63 = ssub.s32 %s22, %s34
      %p64 = scmp.eq.s32.totalorder %s63, 0
      %s66 = sadd.s32 %s65, 1
      %s67 = scalar_select %p64, %s65, %s66
      %p70 = pneg %p64
      %p71 = scmp.eq.s32.totalorder %s15, 7
      %p72 = por %p70, %p71
      %p73 = scmp.ne.s32.totalorder %s65, %s68
      %p74 = scmp.eq.s32.totalorder %s15, 0
      %p75 = por %p73, %p74
      %p76 = scmp.ne.s32.totalorder %s65, %s68
      %p77 = scmp.eq.s32.totalorder %s20, 7
      %p78 = por %p76, %p77
      %p79 = scmp.ne.s32.totalorder %s68, %s69
      %p80 = scmp.eq.s32.totalorder %s20, 0
      %p81 = por %p79, %p80
      %p82 = scmp.ne.s32.totalorder %s68, %s69
      %p83 = scmp.eq.s32.totalorder %s21, 7
      %p84 = por %p82, %p83
      %p86 = scmp.ne.s32.totalorder %s69, %s85
      %p87 = scmp.eq.s32.totalorder %s21, 0
      %p88 = por %p86, %p87
      %s89 = ssub.s32 %s22, %s34
      %p90 = scmp.eq.s32.totalorder %s89, 0
      %s92 = sadd.s32 %s91, 1
      %s93 = scalar_select %p90, %s91, %s92
      %p96 = pneg %p90
      %p97 = scmp.eq.s32.totalorder %s15, 7
      %p98 = por %p96, %p97
      %p99 = scmp.ne.s32.totalorder %s91, %s94
      %p100 = scmp.eq.s32.totalorder %s15, 0
      %p101 = por %p99, %p100
      %p102 = scmp.ne.s32.totalorder %s91, %s94
      %p103 = scmp.eq.s32.totalorder %s20, 7
      %p104 = por %p102, %p103
      %p105 = scmp.ne.s32.totalorder %s94, %s95
      %p106 = scmp.eq.s32.totalorder %s20, 0
      %p107 = por %p105, %p106
      %p108 = scmp.ne.s32.totalorder %s94, %s95
      %p109 = scmp.eq.s32.totalorder %s21, 7
      %p110 = por %p108, %p109
      %p112 = scmp.ne.s32.totalorder %s95, %s111
      %p113 = scmp.eq.s32.totalorder %s21, 0
      %p114 = por %p112, %p113
      %s115 = ssub.s32 %s22, %s34
      %s116 = ssub.s32 %s23, %s30
      %s117 = sor.u32 %s115, %s116
      %p118 = scmp.eq.s32.totalorder %s117, 0
      %s120 = sadd.s32 %s119, 1
      %s121 = scalar_select %p118, %s119, %s120
      %p124 = pneg %p118
      %p125 = scmp.eq.s32.totalorder %s15, 7
      %p126 = por %p124, %p125
      %p127 = scmp.ne.s32.totalorder %s119, %s122
      %p128 = scmp.eq.s32.totalorder %s15, 0
      %p129 = por %p127, %p128
      %p130 = scmp.ne.s32.totalorder %s119, %s122
      %p131 = scmp.eq.s32.totalorder %s20, 7
      %p132 = por %p130, %p131
      %p133 = scmp.ne.s32.totalorder %s122, %s123
      %p134 = scmp.eq.s32.totalorder %s20, 0
      %p135 = por %p133, %p134
      %p136 = scmp.ne.s32.totalorder %s122, %s123
      %p137 = scmp.eq.s32.totalorder %s21, 7
      %p138 = por %p136, %p137
      %p140 = scmp.ne.s32.totalorder %s123, %s139
      %p141 = scmp.eq.s32.totalorder %s21, 0
      %p142 = por %p140, %p141
      %s143 = ssub.s32 %s22, %s34
      %s144 = ssub.s32 %s23, %s30
      %s145 = sor.u32 %s143, %s144
      %p146 = scmp.eq.s32.totalorder %s145, 0
      %s148 = sadd.s32 %s147, 1
      %s149 = scalar_select %p146, %s147, %s148
      %p152 = pneg %p146
      %p153 = scmp.eq.s32.totalorder %s15, 7
      %p154 = por %p152, %p153
      %p155 = scmp.ne.s32.totalorder %s147, %s150
      %p156 = scmp.eq.s32.totalorder %s15, 0
      %p157 = por %p155, %p156
      %p158 = scmp.ne.s32.totalorder %s147, %s150
      %p159 = scmp.eq.s32.totalorder %s20, 7
      %p160 = por %p158, %p159
      %p161 = scmp.ne.s32.totalorder %s150, %s151
      %p162 = scmp.eq.s32.totalorder %s20, 0
      %p163 = por %p161, %p162
      %p164 = scmp.ne.s32.totalorder %s150, %s151
      %p165 = scmp.eq.s32.totalorder %s21, 7
      %p166 = por %p164, %p165
      %p168 = scmp.ne.s32.totalorder %s151, %s167
      %p169 = scmp.eq.s32.totalorder %s21, 0
      %p170 = por %p168, %p169
      %s171 = ssub.s32 %s22, %s34
      %s172 = ssub.s32 %s23, %s30
      %s173 = sor.u32 %s171, %s172
      %p174 = scmp.eq.s32.totalorder %s173, 0
      %s176 = sadd.s32 %s175, 1
      %s177 = scalar_select %p174, %s175, %s176
      %p180 = pneg %p174
      %p181 = scmp.eq.s32.totalorder %s15, 7
      %p182 = por %p180, %p181
      %p183 = scmp.ne.s32.totalorder %s175, %s178
      %p184 = scmp.eq.s32.totalorder %s15, 0
      %p185 = por %p183, %p184
      %p186 = scmp.ne.s32.totalorder %s175, %s178
      %p187 = scmp.eq.s32.totalorder %s20, 7
      %p188 = por %p186, %p187
      %p189 = scmp.ne.s32.totalorder %s178, %s179
      %p190 = scmp.eq.s32.totalorder %s20, 0
      %p191 = por %p189, %p190
      %p192 = scmp.ne.s32.totalorder %s178, %s179
      %p193 = scmp.eq.s32.totalorder %s21, 7
      %p194 = por %p192, %p193
      %p196 = scmp.ne.s32.totalorder %s179, %s195
      %p197 = scmp.eq.s32.totalorder %s21, 0
      %p198 = por %p196, %p197
      %p199 = scmp.le.s32.totalorder 1, %s15
      %p200 = scmp.lt.s32.totalorder %s15, 9
      %p201 = pnand %p199, %p200
      %p202 = pneg %p201
      // Predicated region
      $region9: #{tpu_custom_call.1} parent=5 // pred_check
        _
      $region10: #{tpu_custom_call.1} parent=5 // pred_check_branch
        %204 = sbr.rel (%p201) target = $region12
      $region11: #{tpu_custom_call.1} parent=5 // pred_region
        %s205 = ssub.s32 %s15, 1
      $region12: #{tpu_custom_call.1} parent=5 // pred_fallthru
        _
      %p206 = scmp.lt.s32.totalorder %s15, 8
      // Predicated region
      $region13: #{tpu_custom_call.1} parent=5 // pred_check
        %p207 = pneg %p206
      $region14: #{tpu_custom_call.1} parent=5 // pred_check_branch
        %209 = sbr.rel (%p207) target = $region16
      $region15: #{tpu_custom_call.1} parent=5 // pred_region
        // Predicated region
        $region17: #{tpu_custom_call.1} parent=15 // pred_check
          %p210 = pneg %p49
        $region18: #{tpu_custom_call.1} parent=15 // pred_check_branch
          %212 = sbr.rel (%p210) target = $region20
        $region19: #{tpu_custom_call.1} parent=15 // pred_region
          %s213 = smul.u32 16, %s23
          %p214 = scmp.lt.s32.totalorder %s22, 3
          %s215 = scalar_select %p214, %s22, 3
          %p216 = scmp.lt.s32.totalorder %s213, 31
          %s217 = scalar_select %p216, %s213, 31
          %s218 = smul.addr %s215, 32
          %s219 = sadd.s32 %s217, %s218
          %s220 = smul.addr %s219, 8
          %s221 = scalar_lea.vmem %s0, %s220
          %s222 = smul.u32 16, %s23
        $region20: #{tpu_custom_call.1} parent=15 // pred_fallthru
          _
        // Predicated region
        $region21: #{tpu_custom_call.1} parent=15 // pred_check
          %p223 = pneg %p75
        $region22: #{tpu_custom_call.1} parent=15 // pred_check_branch
          %225 = sbr.rel (%p223) target = $region24
        $region23: #{tpu_custom_call.1} parent=15 // pred_region
          %p226 = scmp.lt.s32.totalorder %s22, 3
          %s227 = scalar_select %p226, %s22, 3
          %s228 = smul.addr %s227, 32
          %s229 = smul.addr %s228, 8
          %s230 = scalar_lea.vmem %s1, %s229
        $region24: #{tpu_custom_call.1} parent=15 // pred_fallthru
          _
        // Predicated region
        $region25: #{tpu_custom_call.1} parent=15 // pred_check
          %p231 = pneg %p101
        $region26: #{tpu_custom_call.1} parent=15 // pred_check_branch
          %233 = sbr.rel (%p231) target = $region28
        $region27: #{tpu_custom_call.1} parent=15 // pred_region
          %p234 = scmp.lt.s32.totalorder %s22, 3
          %s235 = scalar_select %p234, %s22, 3
          %s236 = smul.addr %s235, 32
          %s237 = smul.addr %s236, 8
          %s238 = scalar_lea.vmem %s2, %s237
        $region28: #{tpu_custom_call.1} parent=15 // pred_fallthru
          _
        // Predicated region
        $region29: #{tpu_custom_call.1} parent=15 // pred_check
          %p239 = pneg %p129
        $region30: #{tpu_custom_call.1} parent=15 // pred_check_branch
          %241 = sbr.rel (%p239) target = $region32
        $region31: #{tpu_custom_call.1} parent=15 // pred_region
          %s242 = smul.u32 4, %s23
          %p243 = scmp.lt.s32.totalorder %s22, 3
          %s244 = scalar_select %p243, %s22, 3
          %p245 = scmp.lt.s32.totalorder %s242, 7
          %s246 = scalar_select %p245, %s242, 7
          %s247 = smul.addr %s246, 2
          %s248 = smul.addr %s244, 16
          %s249 = sadd.s32 %s247, %s248
          %s250 = smul.addr %s249, 8
          %s251 = scalar_lea.vmem %s3, %s250
          %s252 = smul.u32 4, %s23
        $region32: #{tpu_custom_call.1} parent=15 // pred_fallthru
          _
      $region16: #{tpu_custom_call.1} parent=5 // pred_fallthru
        _
      %p253 = scmp.le.s32.totalorder 1, %s15
      %p254 = scmp.lt.s32.totalorder %s15, 9
      %p255 = pnand %p253, %p254
      %p256 = pneg %p255
      // Predicated region
      $region33: #{tpu_custom_call.1} parent=5 // pred_check
        _
      $region34: #{tpu_custom_call.1} parent=5 // pred_check_branch
        %258 = sbr.rel (%p255) target = $region36
      $region35: #{tpu_custom_call.1} parent=5 // pred_region
        %s259 = ssub.s32 %s15, 1
        %s260 = smul.u32 16, %s25
        %p261 = scmp.lt.s32.totalorder %s24, 3
        %s262 = scalar_select %p261, %s24, 3
        %p263 = scmp.lt.s32.totalorder %s260, 31
        %s264 = scalar_select %p263, %s260, 31
        %s265 = smul.addr %s262, 32
        %s266 = sadd.s32 %s264, %s265
        %s267 = smul.addr %s266, 8
        %s268 = scalar_lea.vmem %s0, %s267
        %p269 = pneg %p55
        %p270 = pneg %p52
        %p271 = scmp.lt.s32.totalorder %s24, 3
        %s272 = scalar_select %p271, %s24, 3
        %s273 = smul.addr %s272, 32
        %s274 = smul.addr %s273, 8
        %s275 = scalar_lea.vmem %s1, %s274
        %p276 = pneg %p81
        %p277 = pneg %p78
        %p278 = scmp.lt.s32.totalorder %s24, 3
        %s279 = scalar_select %p278, %s24, 3
        %s280 = smul.addr %s279, 32
        %s281 = smul.addr %s280, 8
        %s282 = scalar_lea.vmem %s2, %s281
        %p283 = pneg %p107
        %p284 = pneg %p104
        %s285 = smul.u32 4, %s25
        %p286 = scmp.lt.s32.totalorder %s24, 3
        %s287 = scalar_select %p286, %s24, 3
        %p288 = scmp.lt.s32.totalorder %s285, 7
        %s289 = scalar_select %p288, %s285, 7
        %s290 = smul.addr %s289, 2
        %s291 = smul.addr %s287, 16
        %s292 = sadd.s32 %s290, %s291
        %s293 = smul.addr %s292, 8
        %s294 = scalar_lea.vmem %s3, %s293
        %p295 = pneg %p135
        %p296 = pneg %p132
        %p297 = pneg %p163
        %p298 = pneg %p160
        %s299 = smul.u32 16, %s25
        %p300 = scmp.lt.s32.totalorder %s24, 3
        %s301 = scalar_select %p300, %s24, 3
        %p302 = scmp.lt.s32.totalorder %s299, 31
        %s303 = scalar_select %p302, %s299, 31
        %s304 = smul.addr %s301, 32
        %s305 = sadd.s32 %s303, %s304
        %s306 = smul.addr %s305, 8
        %s307 = scalar_lea.vmem %s4, %s306
        %p308 = pneg %p191
        %p309 = pneg %p188
        %s310 = sand.u32 %s178, 1
        %s311 = scalar_lea.sflag [#allocation3], %s310
        %s312 = sand.u32 %s178, 1
        %s313 = smul.addr %s312, 256
        %s314 = scalar_lea.vmem [#allocation2], %s313
        %s315 = smul.u32 16, %s25
        %p316 = scmp.lt.s32.totalorder %s24, 3
        %s317 = scalar_select %p316, %s24, 3
        %p318 = scmp.lt.s32.totalorder %s315, 31
        %s319 = scalar_select %p318, %s315, 31
        %s320 = smul.addr %s317, 32
        %s321 = sadd.s32 %s319, %s320
        %s322 = smul.addr %s321, 8
        %s323 = scalar_lea.vmem %s0, %s322
        %s324 = smul.u32 16, %s25
        %p325 = scmp.lt.s32.totalorder %s24, 3
        %s326 = scalar_select %p325, %s24, 3
        %s327 = smul.addr %s326, 32
        %s328 = smul.addr %s327, 8
        %s329 = scalar_lea.vmem %s1, %s328
        %p330 = scmp.lt.s32.totalorder %s24, 3
        %s331 = scalar_select %p330, %s24, 3
        %s332 = smul.addr %s331, 32
        %s333 = smul.addr %s332, 8
        %s334 = scalar_lea.vmem %s2, %s333
        %s335 = smul.u32 4, %s25
        %p336 = scmp.lt.s32.totalorder %s24, 3
        %s337 = scalar_select %p336, %s24, 3
        %p338 = scmp.lt.s32.totalorder %s335, 7
        %s339 = scalar_select %p338, %s335, 7
        %s340 = smul.addr %s339, 2
        %s341 = smul.addr %s337, 16
        %s342 = sadd.s32 %s340, %s341
        %s343 = smul.addr %s342, 8
        %s344 = scalar_lea.vmem %s3, %s343
        %s345 = smul.u32 4, %s25
        %s346 = smul.u32 16, %s25
        %p347 = scmp.lt.s32.totalorder %s24, 3
        %s348 = scalar_select %p347, %s24, 3
        %p349 = scmp.lt.s32.totalorder %s346, 31
        %s350 = scalar_select %p349, %s346, 31
        %s351 = smul.addr %s348, 32
        %s352 = sadd.s32 %s350, %s351
        %s353 = smul.addr %s352, 8
        %s354 = scalar_lea.vmem %s4, %s353
        %s355 = smul.u32 16, %s25
        %s356 = smul.u32 16, %s25
        %v359 = vld [vmem:[%s323] sm:$0xff]
        %v360 = vld [vmem:[%s323 + $0x8] sm:$0xff]
        %v361 = vld [vmem:[%s323 + $0x10] sm:$0xff]
        %v362 = vld [vmem:[%s323 + $0x18] sm:$0xff]
        %v363 = vld [vmem:[%s323 + $0x20] sm:$0xff]
        %v364 = vld [vmem:[%s323 + $0x28] sm:$0xff]
        %v365 = vld [vmem:[%s323 + $0x30] sm:$0xff]
        %v366 = vld [vmem:[%s323 + $0x38] sm:$0xff]
        %v367 = vld [vmem:[%s323 + $0x40] sm:$0xff]
        %v368 = vld [vmem:[%s323 + $0x48] sm:$0xff]
        %v369 = vld [vmem:[%s323 + $0x50] sm:$0xff]
        %v370 = vld [vmem:[%s323 + $0x58] sm:$0xff]
        %v371 = vld [vmem:[%s323 + $0x60] sm:$0xff]
        %v372 = vld [vmem:[%s323 + $0x68] sm:$0xff]
        %v373 = vld [vmem:[%s323 + $0x70] sm:$0xff]
        %v374 = vld [vmem:[%s323 + $0x78] sm:$0xff]
        %v375 = vmul.f32 %v359, 0.125
        %v376 = vmul.f32 %v360, 0.125
        %v377 = vmul.f32 %v361, 0.125
        %v378 = vmul.f32 %v362, 0.125
        %v379 = vmul.f32 %v363, 0.125
        %v380 = vmul.f32 %v364, 0.125
        %v381 = vmul.f32 %v365, 0.125
        %v382 = vmul.f32 %v366, 0.125
        %v383 = vmul.f32 %v367, 0.125
        %v384 = vmul.f32 %v368, 0.125
        %v385 = vmul.f32 %v369, 0.125
        %v386 = vmul.f32 %v370, 0.125
        %v387 = vmul.f32 %v371, 0.125
        %v388 = vmul.f32 %v372, 0.125
        %v389 = vmul.f32 %v373, 0.125
        %v390 = vmul.f32 %v374, 0.125
        %v391 = vld [vmem:[%s329] sm:$0xff]
        %v392 = vld [vmem:[%s329 + $0x8] sm:$0xff]
        %v393 = vld [vmem:[%s329 + $0x10] sm:$0xff]
        %v394 = vld [vmem:[%s329 + $0x18] sm:$0xff]
        %v395 = vld [vmem:[%s329 + $0x20] sm:$0xff]
        %v396 = vld [vmem:[%s329 + $0x28] sm:$0xff]
        %v397 = vld [vmem:[%s329 + $0x30] sm:$0xff]
        %v398 = vld [vmem:[%s329 + $0x38] sm:$0xff]
        %v399 = vld [vmem:[%s329 + $0x40] sm:$0xff]
        %v400 = vld [vmem:[%s329 + $0x48] sm:$0xff]
        %v401 = vld [vmem:[%s329 + $0x50] sm:$0xff]
        %v402 = vld [vmem:[%s329 + $0x58] sm:$0xff]
        %v403 = vld [vmem:[%s329 + $0x60] sm:$0xff]
        %v404 = vld [vmem:[%s329 + $0x68] sm:$0xff]
        %v405 = vld [vmem:[%s329 + $0x70] sm:$0xff]
        %v406 = vld [vmem:[%s329 + $0x78] sm:$0xff]
        %vm407 = vcmask 523264
        %v409 = vsel %vm407, %v375, 0
        %v412 = vsel %vm407, %v376, 0
        %v415 = vsel %vm407, %v377, 0
        %v418 = vsel %vm407, %v378, 0
        %v421 = vsel %vm407, %v379, 0
        %v424 = vsel %vm407, %v380, 0
        %v427 = vsel %vm407, %v381, 0
        %v430 = vsel %vm407, %v382, 0
        %v433 = vsel %vm407, %v383, 0
        %v436 = vsel %vm407, %v384, 0
        %v439 = vsel %vm407, %v385, 0
        %v442 = vsel %vm407, %v386, 0
        %v445 = vsel %vm407, %v387, 0
        %v448 = vsel %vm407, %v388, 0
        %v451 = vsel %vm407, %v389, 0
        %v454 = vsel %vm407, %v390, 0
        %v457 = vsel %vm407, %v391, 0
        %v460 = vsel %vm407, %v392, 0
        %v463 = vsel %vm407, %v393, 0
        %v466 = vsel %vm407, %v394, 0
        %v469 = vsel %vm407, %v395, 0
        %v472 = vsel %vm407, %v396, 0
        %v475 = vsel %vm407, %v397, 0
        %v478 = vsel %vm407, %v398, 0
        %v481 = vsel %vm407, %v399, 0
        %v484 = vsel %vm407, %v400, 0
        %v487 = vsel %vm407, %v401, 0
        %v490 = vsel %vm407, %v402, 0
        %v493 = vsel %vm407, %v403, 0
        %v496 = vsel %vm407, %v404, 0
        %v499 = vsel %vm407, %v405, 0
        %v502 = vsel %vm407, %v406, 0
        %504 = vmatpush.xpose.msra.mxu0 %v502
        %505 = vmatpush.xpose.msra.mxu0 %v499
        %506 = vmatpush.xpose.msra.mxu0 %v496
        %507 = vmatpush.xpose.msra.mxu0 %v493
        %508 = vmatpush.xpose.msra.mxu0 %v490
        %509 = vmatpush.xpose.msra.mxu0 %v487
        %510 = vmatpush.xpose.msra.mxu0 %v484
        %511 = vmatpush.xpose.msra.mxu0 %v481
        %512 = vmatpush.xpose.msra.mxu0 %v478
        %513 = vmatpush.xpose.msra.mxu0 %v475
        %514 = vmatpush.xpose.msra.mxu0 %v472
        %515 = vmatpush.xpose.msra.mxu0 %v469
        %516 = vmatpush.xpose.msra.mxu0 %v466
        %517 = vmatpush.xpose.msra.mxu0 %v463
        %518 = vmatpush.xpose.msra.mxu0 %v460
        %519 = vmatpush.xpose.msra.mxu0 %v457
        %520 = vmatmul.f32.gmra.mxu0 %v409
        %v521 = vpop.f32.mrf.mxu0
        %v522 = vadd.f32 0.0, %v521
        %523 = vmatmul.f32.gmra.mxu0 %v412
        %v524 = vpop.f32.mrf.mxu0
        %v525 = vadd.f32 0.0, %v524
        %526 = vmatmul.f32.gmra.mxu0 %v415
        %v527 = vpop.f32.mrf.mxu0
        %v528 = vadd.f32 0.0, %v527
        %529 = vmatmul.f32.gmra.mxu0 %v418
        %v530 = vpop.f32.mrf.mxu0
        %v531 = vadd.f32 0.0, %v530
        %532 = vmatmul.f32.gmra.mxu0 %v421
        %v533 = vpop.f32.mrf.mxu0
        %v534 = vadd.f32 0.0, %v533
        %535 = vmatmul.f32.gmra.mxu0 %v424
        %v536 = vpop.f32.mrf.mxu0
        %v537 = vadd.f32 0.0, %v536
        %538 = vmatmul.f32.gmra.mxu0 %v427
        %v539 = vpop.f32.mrf.mxu0
        %v540 = vadd.f32 0.0, %v539
        %541 = vmatmul.f32.gmra.mxu0 %v430
        %v542 = vpop.f32.mrf.mxu0
        %v543 = vadd.f32 0.0, %v542
        %544 = vmatmul.f32.gmra.mxu0 %v433
        %v545 = vpop.f32.mrf.mxu0
        %v546 = vadd.f32 0.0, %v545
        %547 = vmatmul.f32.gmra.mxu0 %v436
        %v548 = vpop.f32.mrf.mxu0
        %v549 = vadd.f32 0.0, %v548
        %550 = vmatmul.f32.gmra.mxu0 %v439
        %v551 = vpop.f32.mrf.mxu0
        %v552 = vadd.f32 0.0, %v551
        %553 = vmatmul.f32.gmra.mxu0 %v442
        %v554 = vpop.f32.mrf.mxu0
        %v555 = vadd.f32 0.0, %v554
        %556 = vmatmul.f32.gmra.mxu0 %v445
        %v557 = vpop.f32.mrf.mxu0
        %v558 = vadd.f32 0.0, %v557
        %559 = vmatmul.f32.gmra.mxu0 %v448
        %v560 = vpop.f32.mrf.mxu0
        %v561 = vadd.f32 0.0, %v560
        %562 = vmatmul.f32.gmra.mxu0 %v451
        %v563 = vpop.f32.mrf.mxu0
        %v564 = vadd.f32 0.0, %v563
        %565 = vmatmul.f32.gmra.mxu0 %v454
        %v566 = vpop.f32.mrf.mxu0
        %v567 = vadd.f32 0.0, %v566
        %568 = vdwg.mxu0
        %v569 = vld [vmem:[%s344] sm:$0xff]
        %v570 = vld [vmem:[%s344 + $0x10] sm:$0xff]
        %v571 = vld [vmem:[%s344 + $0x20] sm:$0xff]
        %v572 = vld [vmem:[%s344 + $0x30] sm:$0xff]
        %vm573 = vnez %v569
        %vm574 = vnez %v570
        %vm575 = vnez %v571
        %vm576 = vnez %v572
        %v577 = vsel %vm573, 16843009, 0
        %v578 = vsel %vm574, 16843009, 0
        %v579 = vsel %vm575, 16843009, 0
        %v580 = vsel %vm576, 16843009, 0
        %v581 = vunpack.c.0.s8 %v577
        %v582 = vunpack.c.1.s8 %v577
        %v583 = vunpack.c.2.s8 %v577
        %v584 = vunpack.c.3.s8 %v577
        %v585 = vunpack.c.0.s8 %v578
        %v586 = vunpack.c.1.s8 %v578
        %v587 = vunpack.c.2.s8 %v578
        %v588 = vunpack.c.3.s8 %v578
        %v589 = vunpack.c.0.s8 %v579
        %v590 = vunpack.c.1.s8 %v579
        %v591 = vunpack.c.2.s8 %v579
        %v592 = vunpack.c.3.s8 %v579
        %v593 = vunpack.c.0.s8 %v580
        %v594 = vunpack.c.1.s8 %v580
        %v595 = vunpack.c.2.s8 %v580
        %v596 = vunpack.c.3.s8 %v580
        %v597 = vpack.c.b16 %v581, %v581
        %v598 = vpack.c.b8 %v597, %v597
        %v599 = vpack.c.b16 %v582, %v582
        %v600 = vpack.c.b8 %v599, %v599
        %v601 = vpack.c.b16 %v583, %v583
        %v602 = vpack.c.b8 %v601, %v601
        %v603 = vpack.c.b16 %v584, %v584
        %v604 = vpack.c.b8 %v603, %v603
        %v605 = vpack.c.b16 %v585, %v585
        %v606 = vpack.c.b8 %v605, %v605
        %v607 = vpack.c.b16 %v586, %v586
        %v608 = vpack.c.b8 %v607, %v607
        %v609 = vpack.c.b16 %v587, %v587
        %v610 = vpack.c.b8 %v609, %v609
        %v611 = vpack.c.b16 %v588, %v588
        %v612 = vpack.c.b8 %v611, %v611
        %v613 = vpack.c.b16 %v589, %v589
        %v614 = vpack.c.b8 %v613, %v613
        %v615 = vpack.c.b16 %v590, %v590
        %v616 = vpack.c.b8 %v615, %v615
        %v617 = vpack.c.b16 %v591, %v591
        %v618 = vpack.c.b8 %v617, %v617
        %v619 = vpack.c.b16 %v592, %v592
        %v620 = vpack.c.b8 %v619, %v619
        %v621 = vpack.c.b16 %v593, %v593
        %v622 = vpack.c.b8 %v621, %v621
        %v623 = vpack.c.b16 %v594, %v594
        %v624 = vpack.c.b8 %v623, %v623
        %v625 = vpack.c.b16 %v595, %v595
        %v626 = vpack.c.b8 %v625, %v625
        %v627 = vpack.c.b16 %v596, %v596
        %v628 = vpack.c.b8 %v627, %v627
        %vm629 = vnez %v598
        %vm630 = vnez %v600
        %vm631 = vnez %v602
        %vm632 = vnez %v604
        %vm633 = vnez %v606
        %vm634 = vnez %v608
        %vm635 = vnez %v610
        %vm636 = vnez %v612
        %vm637 = vnez %v614
        %vm638 = vnez %v616
        %vm639 = vnez %v618
        %vm640 = vnez %v620
        %vm641 = vnez %v622
        %vm642 = vnez %v624
        %vm643 = vnez %v626
        %vm644 = vnez %v628
        %v645 = vsel %vm629, 16843009, 0
        %v646 = vsel %vm630, 16843009, 0
        %v647 = vsel %vm631, 16843009, 0
        %v648 = vsel %vm632, 16843009, 0
        %v649 = vsel %vm633, 16843009, 0
        %v650 = vsel %vm634, 16843009, 0
        %v651 = vsel %vm635, 16843009, 0
        %v652 = vsel %vm636, 16843009, 0
        %v653 = vsel %vm637, 16843009, 0
        %v654 = vsel %vm638, 16843009, 0
        %v655 = vsel %vm639, 16843009, 0
        %v656 = vsel %vm640, 16843009, 0
        %v657 = vsel %vm641, 16843009, 0
        %v658 = vsel %vm642, 16843009, 0
        %v659 = vsel %vm643, 16843009, 0
        %v660 = vsel %vm644, 16843009, 0
        %v661 = vunpack.c.0.s8 %v645
        %v662 = vunpack.c.0.s8 %v646
        %v663 = vunpack.c.0.s8 %v647
        %v664 = vunpack.c.0.s8 %v648
        %v665 = vunpack.c.0.s8 %v649
        %v666 = vunpack.c.0.s8 %v650
        %v667 = vunpack.c.0.s8 %v651
        %v668 = vunpack.c.0.s8 %v652
        %v669 = vunpack.c.0.s8 %v653
        %v670 = vunpack.c.0.s8 %v654
        %v671 = vunpack.c.0.s8 %v655
        %v672 = vunpack.c.0.s8 %v656
        %v673 = vunpack.c.0.s8 %v657
        %v674 = vunpack.c.0.s8 %v658
        %v675 = vunpack.c.0.s8 %v659
        %v676 = vunpack.c.0.s8 %v660
        %vm677 = vcmp.ne.s32.totalorder %v661, 0
        %vm678 = vcmp.ne.s32.totalorder %v662, 0
        %vm679 = vcmp.ne.s32.totalorder %v663, 0
        %vm680 = vcmp.ne.s32.totalorder %v664, 0
        %vm681 = vcmp.ne.s32.totalorder %v665, 0
        %vm682 = vcmp.ne.s32.totalorder %v666, 0
        %vm683 = vcmp.ne.s32.totalorder %v667, 0
        %vm684 = vcmp.ne.s32.totalorder %v668, 0
        %vm685 = vcmp.ne.s32.totalorder %v669, 0
        %vm686 = vcmp.ne.s32.totalorder %v670, 0
        %vm687 = vcmp.ne.s32.totalorder %v671, 0
        %vm688 = vcmp.ne.s32.totalorder %v672, 0
        %vm689 = vcmp.ne.s32.totalorder %v673, 0
        %vm690 = vcmp.ne.s32.totalorder %v674, 0
        %vm691 = vcmp.ne.s32.totalorder %v675, 0
        %vm692 = vcmp.ne.s32.totalorder %v676, 0
        %v693 = vsel %vm677, -1e+09, %v522
        %v694 = vsel %vm678, -1e+09, %v525
        %v695 = vsel %vm679, -1e+09, %v528
        %v696 = vsel %vm680, -1e+09, %v531
        %v697 = vsel %vm681, -1e+09, %v534
        %v698 = vsel %vm682, -1e+09, %v537
        %v699 = vsel %vm683, -1e+09, %v540
        %v700 = vsel %vm684, -1e+09, %v543
        %v701 = vsel %vm685, -1e+09, %v546
        %v702 = vsel %vm686, -1e+09, %v549
        %v703 = vsel %vm687, -1e+09, %v552
        %v704 = vsel %vm688, -1e+09, %v555
        %v705 = vsel %vm689, -1e+09, %v558
        %v706 = vsel %vm690, -1e+09, %v561
        %v707 = vsel %vm691, -1e+09, %v564
        %v708 = vsel %vm692, -1e+09, %v567
        %709 = vmax.xlane.f32.xlu0 %v693
        %v710 = vpop.xlane.xlu0 %709
        %711 = vmax.xlane.f32.xlu0 %v694
        %v712 = vpop.xlane.xlu0 %711
        %713 = vmax.xlane.f32.xlu0 %v695
        %v714 = vpop.xlane.xlu0 %713
        %715 = vmax.xlane.f32.xlu0 %v696
        %v716 = vpop.xlane.xlu0 %715
        %717 = vmax.xlane.f32.xlu0 %v697
        %v718 = vpop.xlane.xlu0 %717
        %719 = vmax.xlane.f32.xlu0 %v698
        %v720 = vpop.xlane.xlu0 %719
        %721 = vmax.xlane.f32.xlu0 %v699
        %v722 = vpop.xlane.xlu0 %721
        %723 = vmax.xlane.f32.xlu0 %v700
        %v724 = vpop.xlane.xlu0 %723
        %725 = vmax.xlane.f32.xlu0 %v701
        %v726 = vpop.xlane.xlu0 %725
        %727 = vmax.xlane.f32.xlu0 %v702
        %v728 = vpop.xlane.xlu0 %727
        %729 = vmax.xlane.f32.xlu0 %v703
        %v730 = vpop.xlane.xlu0 %729
        %731 = vmax.xlane.f32.xlu0 %v704
        %v732 = vpop.xlane.xlu0 %731
        %733 = vmax.xlane.f32.xlu0 %v705
        %v734 = vpop.xlane.xlu0 %733
        %735 = vmax.xlane.f32.xlu0 %v706
        %v736 = vpop.xlane.xlu0 %735
        %737 = vmax.xlane.f32.xlu0 %v707
        %v738 = vpop.xlane.xlu0 %737
        %739 = vmax.xlane.f32.xlu0 %v708
        %v740 = vpop.xlane.xlu0 %739
        %v741 = vsub.f32 -inf, %v710
        %v742 = vsub.f32 -inf, %v712
        %v743 = vsub.f32 -inf, %v714
        %v744 = vsub.f32 -inf, %v716
        %v745 = vsub.f32 -inf, %v718
        %v746 = vsub.f32 -inf, %v720
        %v747 = vsub.f32 -inf, %v722
        %v748 = vsub.f32 -inf, %v724
        %v749 = vsub.f32 -inf, %v726
        %v750 = vsub.f32 -inf, %v728
        %v751 = vsub.f32 -inf, %v730
        %v752 = vsub.f32 -inf, %v732
        %v753 = vsub.f32 -inf, %v734
        %v754 = vsub.f32 -inf, %v736
        %v755 = vsub.f32 -inf, %v738
        %v756 = vsub.f32 -inf, %v740
        %v757 = vmul.f32 %v741, 1.442695
        %v758 = vpow.pop %v757
        %v759 = vmul.f32 %v742, 1.442695
        %v760 = vpow.pop %v759
        %v761 = vmul.f32 %v743, 1.442695
        %v762 = vpow.pop %v761
        %v763 = vmul.f32 %v744, 1.442695
        %v764 = vpow.pop %v763
        %v765 = vmul.f32 %v745, 1.442695
        %v766 = vpow.pop %v765
        %v767 = vmul.f32 %v746, 1.442695
        %v768 = vpow.pop %v767
        %v769 = vmul.f32 %v747, 1.442695
        %v770 = vpow.pop %v769
        %v771 = vmul.f32 %v748, 1.442695
        %v772 = vpow.pop %v771
        %v773 = vmul.f32 %v749, 1.442695
        %v774 = vpow.pop %v773
        %v775 = vmul.f32 %v750, 1.442695
        %v776 = vpow.pop %v775
        %v777 = vmul.f32 %v751, 1.442695
        %v778 = vpow.pop %v777
        %v779 = vmul.f32 %v752, 1.442695
        %v780 = vpow.pop %v779
        %v781 = vmul.f32 %v753, 1.442695
        %v782 = vpow.pop %v781
        %v783 = vmul.f32 %v754, 1.442695
        %v784 = vpow.pop %v783
        %v785 = vmul.f32 %v755, 1.442695
        %v786 = vpow.pop %v785
        %v787 = vmul.f32 %v756, 1.442695
        %v788 = vpow.pop %v787
        %v789 = vmul.f32 %v758, 0.0
        %v790 = vmul.f32 %v760, 0.0
        %v791 = vmul.f32 %v762, 0.0
        %v792 = vmul.f32 %v764, 0.0
        %v793 = vmul.f32 %v766, 0.0
        %v794 = vmul.f32 %v768, 0.0
        %v795 = vmul.f32 %v770, 0.0
        %v796 = vmul.f32 %v772, 0.0
        %v797 = vmul.f32 %v774, 0.0
        %v798 = vmul.f32 %v776, 0.0
        %v799 = vmul.f32 %v778, 0.0
        %v800 = vmul.f32 %v780, 0.0
        %v801 = vmul.f32 %v782, 0.0
        %v802 = vmul.f32 %v784, 0.0
        %v803 = vmul.f32 %v786, 0.0
        %v804 = vmul.f32 %v788, 0.0
        %v805 = vsub.f32 %v693, %v710
        %v806 = vsub.f32 %v694, %v712
        %v807 = vsub.f32 %v695, %v714
        %v808 = vsub.f32 %v696, %v716
        %v809 = vsub.f32 %v697, %v718
        %v810 = vsub.f32 %v698, %v720
        %v811 = vsub.f32 %v699, %v722
        %v812 = vsub.f32 %v700, %v724
        %v813 = vsub.f32 %v701, %v726
        %v814 = vsub.f32 %v702, %v728
        %v815 = vsub.f32 %v703, %v730
        %v816 = vsub.f32 %v704, %v732
        %v817 = vsub.f32 %v705, %v734
        %v818 = vsub.f32 %v706, %v736
        %v819 = vsub.f32 %v707, %v738
        %v820 = vsub.f32 %v708, %v740
        %v821 = vmul.f32 %v805, 1.442695
        %v822 = vpow.pop %v821
        %v823 = vmul.f32 %v806, 1.442695
        %v824 = vpow.pop %v823
        %v825 = vmul.f32 %v807, 1.442695
        %v826 = vpow.pop %v825
        %v827 = vmul.f32 %v808, 1.442695
        %v828 = vpow.pop %v827
        %v829 = vmul.f32 %v809, 1.442695
        %v830 = vpow.pop %v829
        %v831 = vmul.f32 %v810, 1.442695
        %v832 = vpow.pop %v831
        %v833 = vmul.f32 %v811, 1.442695
        %v834 = vpow.pop %v833
        %v835 = vmul.f32 %v812, 1.442695
        %v836 = vpow.pop %v835
        %v837 = vmul.f32 %v813, 1.442695
        %v838 = vpow.pop %v837
        %v839 = vmul.f32 %v814, 1.442695
        %v840 = vpow.pop %v839
        %v841 = vmul.f32 %v815, 1.442695
        %v842 = vpow.pop %v841
        %v843 = vmul.f32 %v816, 1.442695
        %v844 = vpow.pop %v843
        %v845 = vmul.f32 %v817, 1.442695
        %v846 = vpow.pop %v845
        %v847 = vmul.f32 %v818, 1.442695
        %v848 = vpow.pop %v847
        %v849 = vmul.f32 %v819, 1.442695
        %v850 = vpow.pop %v849
        %v851 = vmul.f32 %v820, 1.442695
        %v852 = vpow.pop %v851
        %853 = vadd.xlane.f32.xlu0 %v822
        %v854 = vpop.xlane.xlu0 %853
        %855 = vadd.xlane.f32.xlu0 %v824
        %v856 = vpop.xlane.xlu0 %855
        %857 = vadd.xlane.f32.xlu0 %v826
        %v858 = vpop.xlane.xlu0 %857
        %859 = vadd.xlane.f32.xlu0 %v828
        %v860 = vpop.xlane.xlu0 %859
        %861 = vadd.xlane.f32.xlu0 %v830
        %v862 = vpop.xlane.xlu0 %861
        %863 = vadd.xlane.f32.xlu0 %v832
        %v864 = vpop.xlane.xlu0 %863
        %865 = vadd.xlane.f32.xlu0 %v834
        %v866 = vpop.xlane.xlu0 %865
        %867 = vadd.xlane.f32.xlu0 %v836
        %v868 = vpop.xlane.xlu0 %867
        %869 = vadd.xlane.f32.xlu0 %v838
        %v870 = vpop.xlane.xlu0 %869
        %871 = vadd.xlane.f32.xlu0 %v840
        %v872 = vpop.xlane.xlu0 %871
        %873 = vadd.xlane.f32.xlu0 %v842
        %v874 = vpop.xlane.xlu0 %873
        %875 = vadd.xlane.f32.xlu0 %v844
        %v876 = vpop.xlane.xlu0 %875
        %877 = vadd.xlane.f32.xlu0 %v846
        %v878 = vpop.xlane.xlu0 %877
        %879 = vadd.xlane.f32.xlu0 %v848
        %v880 = vpop.xlane.xlu0 %879
        %881 = vadd.xlane.f32.xlu0 %v850
        %v882 = vpop.xlane.xlu0 %881
        %883 = vadd.xlane.f32.xlu0 %v852
        %v884 = vpop.xlane.xlu0 %883
        %v885 = vadd.f32 %v789, %v854
        %v886 = vadd.f32 %v790, %v856
        %v887 = vadd.f32 %v791, %v858
        %v888 = vadd.f32 %v792, %v860
        %v889 = vadd.f32 %v793, %v862
        %v890 = vadd.f32 %v794, %v864
        %v891 = vadd.f32 %v795, %v866
        %v892 = vadd.f32 %v796, %v868
        %v893 = vadd.f32 %v797, %v870
        %v894 = vadd.f32 %v798, %v872
        %v895 = vadd.f32 %v799, %v874
        %v896 = vadd.f32 %v800, %v876
        %v897 = vadd.f32 %v801, %v878
        %v898 = vadd.f32 %v802, %v880
        %v899 = vadd.f32 %v803, %v882
        %v900 = vadd.f32 %v804, %v884
        %v901 = vld [vmem:[%s329 + $0x80] sm:$0xff]
        %v902 = vld [vmem:[%s329 + $0x88] sm:$0xff]
        %v903 = vld [vmem:[%s329 + $0x90] sm:$0xff]
        %v904 = vld [vmem:[%s329 + $0x98] sm:$0xff]
        %v905 = vld [vmem:[%s329 + $0xa0] sm:$0xff]
        %v906 = vld [vmem:[%s329 + $0xa8] sm:$0xff]
        %v907 = vld [vmem:[%s329 + $0xb0] sm:$0xff]
        %v908 = vld [vmem:[%s329 + $0xb8] sm:$0xff]
        %v909 = vld [vmem:[%s329 + $0xc0] sm:$0xff]
        %v910 = vld [vmem:[%s329 + $0xc8] sm:$0xff]
        %v911 = vld [vmem:[%s329 + $0xd0] sm:$0xff]
        %v912 = vld [vmem:[%s329 + $0xd8] sm:$0xff]
        %v913 = vld [vmem:[%s329 + $0xe0] sm:$0xff]
        %v914 = vld [vmem:[%s329 + $0xe8] sm:$0xff]
        %v915 = vld [vmem:[%s329 + $0xf0] sm:$0xff]
        %v916 = vld [vmem:[%s329 + $0xf8] sm:$0xff]
        %v918 = vsel %vm407, %v901, 0
        %v921 = vsel %vm407, %v902, 0
        %v924 = vsel %vm407, %v903, 0
        %v927 = vsel %vm407, %v904, 0
        %v930 = vsel %vm407, %v905, 0
        %v933 = vsel %vm407, %v906, 0
        %v936 = vsel %vm407, %v907, 0
        %v939 = vsel %vm407, %v908, 0
        %v942 = vsel %vm407, %v909, 0
        %v945 = vsel %vm407, %v910, 0
        %v948 = vsel %vm407, %v911, 0
        %v951 = vsel %vm407, %v912, 0
        %v954 = vsel %vm407, %v913, 0
        %v957 = vsel %vm407, %v914, 0
        %v960 = vsel %vm407, %v915, 0
        %v963 = vsel %vm407, %v916, 0
        %965 = vmatpush.xpose.msra.mxu0 %v963
        %966 = vmatpush.xpose.msra.mxu0 %v960
        %967 = vmatpush.xpose.msra.mxu0 %v957
        %968 = vmatpush.xpose.msra.mxu0 %v954
        %969 = vmatpush.xpose.msra.mxu0 %v951
        %970 = vmatpush.xpose.msra.mxu0 %v948
        %971 = vmatpush.xpose.msra.mxu0 %v945
        %972 = vmatpush.xpose.msra.mxu0 %v942
        %973 = vmatpush.xpose.msra.mxu0 %v939
        %974 = vmatpush.xpose.msra.mxu0 %v936
        %975 = vmatpush.xpose.msra.mxu0 %v933
        %976 = vmatpush.xpose.msra.mxu0 %v930
        %977 = vmatpush.xpose.msra.mxu0 %v927
        %978 = vmatpush.xpose.msra.mxu0 %v924
        %979 = vmatpush.xpose.msra.mxu0 %v921
        %980 = vmatpush.xpose.msra.mxu0 %v918
        %981 = vmatmul.f32.gmra.mxu0 %v409
        %v982 = vpop.f32.mrf.mxu0
        %v983 = vadd.f32 0.0, %v982
        %984 = vmatmul.f32.gmra.mxu0 %v412
        %v985 = vpop.f32.mrf.mxu0
        %v986 = vadd.f32 0.0, %v985
        %987 = vmatmul.f32.gmra.mxu0 %v415
        %v988 = vpop.f32.mrf.mxu0
        %v989 = vadd.f32 0.0, %v988
        %990 = vmatmul.f32.gmra.mxu0 %v418
        %v991 = vpop.f32.mrf.mxu0
        %v992 = vadd.f32 0.0, %v991
        %993 = vmatmul.f32.gmra.mxu0 %v421
        %v994 = vpop.f32.mrf.mxu0
        %v995 = vadd.f32 0.0, %v994
        %996 = vmatmul.f32.gmra.mxu0 %v424
        %v997 = vpop.f32.mrf.mxu0
        %v998 = vadd.f32 0.0, %v997
        %999 = vmatmul.f32.gmra.mxu0 %v427
        %v1000 = vpop.f32.mrf.mxu0
        %v1001 = vadd.f32 0.0, %v1000
        %1002 = vmatmul.f32.gmra.mxu0 %v430
        %v1003 = vpop.f32.mrf.mxu0
        %v1004 = vadd.f32 0.0, %v1003
        %1005 = vmatmul.f32.gmra.mxu0 %v433
        %v1006 = vpop.f32.mrf.mxu0
        %v1007 = vadd.f32 0.0, %v1006
        %1008 = vmatmul.f32.gmra.mxu0 %v436
        %v1009 = vpop.f32.mrf.mxu0
        %v1010 = vadd.f32 0.0, %v1009
        %1011 = vmatmul.f32.gmra.mxu0 %v439
        %v1012 = vpop.f32.mrf.mxu0
        %v1013 = vadd.f32 0.0, %v1012
        %1014 = vmatmul.f32.gmra.mxu0 %v442
        %v1015 = vpop.f32.mrf.mxu0
        %v1016 = vadd.f32 0.0, %v1015
        %1017 = vmatmul.f32.gmra.mxu0 %v445
        %v1018 = vpop.f32.mrf.mxu0
        %v1019 = vadd.f32 0.0, %v1018
        %1020 = vmatmul.f32.gmra.mxu0 %v448
        %v1021 = vpop.f32.mrf.mxu0
        %v1022 = vadd.f32 0.0, %v1021
        %1023 = vmatmul.f32.gmra.mxu0 %v451
        %v1024 = vpop.f32.mrf.mxu0
        %v1025 = vadd.f32 0.0, %v1024
        %1026 = vmatmul.f32.gmra.mxu0 %v454
        %v1027 = vpop.f32.mrf.mxu0
        %v1028 = vadd.f32 0.0, %v1027
        %1029 = vdwg.mxu0
        %v1030 = vld [vmem:[%s344 + $0x8] sm:$0xff]
        %v1031 = vld [vmem:[%s344 + $0x18] sm:$0xff]
        %v1032 = vld [vmem:[%s344 + $0x28] sm:$0xff]
        %v1033 = vld [vmem:[%s344 + $0x38] sm:$0xff]
        %vm1034 = vnez %v1030
        %vm1035 = vnez %v1031
        %vm1036 = vnez %v1032
        %vm1037 = vnez %v1033
        %v1038 = vsel %vm1034, 16843009, 0
        %v1039 = vsel %vm1035, 16843009, 0
        %v1040 = vsel %vm1036, 16843009, 0
        %v1041 = vsel %vm1037, 16843009, 0
        %v1042 = vunpack.c.0.s8 %v1038
        %v1043 = vunpack.c.1.s8 %v1038
        %v1044 = vunpack.c.2.s8 %v1038
        %v1045 = vunpack.c.3.s8 %v1038
        %v1046 = vunpack.c.0.s8 %v1039
        %v1047 = vunpack.c.1.s8 %v1039
        %v1048 = vunpack.c.2.s8 %v1039
        %v1049 = vunpack.c.3.s8 %v1039
        %v1050 = vunpack.c.0.s8 %v1040
        %v1051 = vunpack.c.1.s8 %v1040
        %v1052 = vunpack.c.2.s8 %v1040
        %v1053 = vunpack.c.3.s8 %v1040
        %v1054 = vunpack.c.0.s8 %v1041
        %v1055 = vunpack.c.1.s8 %v1041
        %v1056 = vunpack.c.2.s8 %v1041
        %v1057 = vunpack.c.3.s8 %v1041
        %v1058 = vpack.c.b16 %v1042, %v1042
        %v1059 = vpack.c.b8 %v1058, %v1058
        %v1060 = vpack.c.b16 %v1043, %v1043
        %v1061 = vpack.c.b8 %v1060, %v1060
        %v1062 = vpack.c.b16 %v1044, %v1044
        %v1063 = vpack.c.b8 %v1062, %v1062
        %v1064 = vpack.c.b16 %v1045, %v1045
        %v1065 = vpack.c.b8 %v1064, %v1064
        %v1066 = vpack.c.b16 %v1046, %v1046
        %v1067 = vpack.c.b8 %v1066, %v1066
        %v1068 = vpack.c.b16 %v1047, %v1047
        %v1069 = vpack.c.b8 %v1068, %v1068
        %v1070 = vpack.c.b16 %v1048, %v1048
        %v1071 = vpack.c.b8 %v1070, %v1070
        %v1072 = vpack.c.b16 %v1049, %v1049
        %v1073 = vpack.c.b8 %v1072, %v1072
        %v1074 = vpack.c.b16 %v1050, %v1050
        %v1075 = vpack.c.b8 %v1074, %v1074
        %v1076 = vpack.c.b16 %v1051, %v1051
        %v1077 = vpack.c.b8 %v1076, %v1076
        %v1078 = vpack.c.b16 %v1052, %v1052
        %v1079 = vpack.c.b8 %v1078, %v1078
        %v1080 = vpack.c.b16 %v1053, %v1053
        %v1081 = vpack.c.b8 %v1080, %v1080
        %v1082 = vpack.c.b16 %v1054, %v1054
        %v1083 = vpack.c.b8 %v1082, %v1082
        %v1084 = vpack.c.b16 %v1055, %v1055
        %v1085 = vpack.c.b8 %v1084, %v1084
        %v1086 = vpack.c.b16 %v1056, %v1056
        %v1087 = vpack.c.b8 %v1086, %v1086
        %v1088 = vpack.c.b16 %v1057, %v1057
        %v1089 = vpack.c.b8 %v1088, %v1088
        %vm1090 = vnez %v1059
        %vm1091 = vnez %v1061
        %vm1092 = vnez %v1063
        %vm1093 = vnez %v1065
        %vm1094 = vnez %v1067
        %vm1095 = vnez %v1069
        %vm1096 = vnez %v1071
        %vm1097 = vnez %v1073
        %vm1098 = vnez %v1075
        %vm1099 = vnez %v1077
        %vm1100 = vnez %v1079
        %vm1101 = vnez %v1081
        %vm1102 = vnez %v1083
        %vm1103 = vnez %v1085
        %vm1104 = vnez %v1087
        %vm1105 = vnez %v1089
        %v1106 = vsel %vm1090, 16843009, 0
        %v1107 = vsel %vm1091, 16843009, 0
        %v1108 = vsel %vm1092, 16843009, 0
        %v1109 = vsel %vm1093, 16843009, 0
        %v1110 = vsel %vm1094, 16843009, 0
        %v1111 = vsel %vm1095, 16843009, 0
        %v1112 = vsel %vm1096, 16843009, 0
        %v1113 = vsel %vm1097, 16843009, 0
        %v1114 = vsel %vm1098, 16843009, 0
        %v1115 = vsel %vm1099, 16843009, 0
        %v1116 = vsel %vm1100, 16843009, 0
        %v1117 = vsel %vm1101, 16843009, 0
        %v1118 = vsel %vm1102, 16843009, 0
        %v1119 = vsel %vm1103, 16843009, 0
        %v1120 = vsel %vm1104, 16843009, 0
        %v1121 = vsel %vm1105, 16843009, 0
        %v1122 = vunpack.c.0.s8 %v1106
        %v1123 = vunpack.c.0.s8 %v1107
        %v1124 = vunpack.c.0.s8 %v1108
        %v1125 = vunpack.c.0.s8 %v1109
        %v1126 = vunpack.c.0.s8 %v1110
        %v1127 = vunpack.c.0.s8 %v1111
        %v1128 = vunpack.c.0.s8 %v1112
        %v1129 = vunpack.c.0.s8 %v1113
        %v1130 = vunpack.c.0.s8 %v1114
        %v1131 = vunpack.c.0.s8 %v1115
        %v1132 = vunpack.c.0.s8 %v1116
        %v1133 = vunpack.c.0.s8 %v1117
        %v1134 = vunpack.c.0.s8 %v1118
        %v1135 = vunpack.c.0.s8 %v1119
        %v1136 = vunpack.c.0.s8 %v1120
        %v1137 = vunpack.c.0.s8 %v1121
        %vm1138 = vcmp.ne.s32.totalorder %v1122, 0
        %vm1139 = vcmp.ne.s32.totalorder %v1123, 0
        %vm1140 = vcmp.ne.s32.totalorder %v1124, 0
        %vm1141 = vcmp.ne.s32.totalorder %v1125, 0
        %vm1142 = vcmp.ne.s32.totalorder %v1126, 0
        %vm1143 = vcmp.ne.s32.totalorder %v1127, 0
        %vm1144 = vcmp.ne.s32.totalorder %v1128, 0
        %vm1145 = vcmp.ne.s32.totalorder %v1129, 0
        %vm1146 = vcmp.ne.s32.totalorder %v1130, 0
        %vm1147 = vcmp.ne.s32.totalorder %v1131, 0
        %vm1148 = vcmp.ne.s32.totalorder %v1132, 0
        %vm1149 = vcmp.ne.s32.totalorder %v1133, 0
        %vm1150 = vcmp.ne.s32.totalorder %v1134, 0
        %vm1151 = vcmp.ne.s32.totalorder %v1135, 0
        %vm1152 = vcmp.ne.s32.totalorder %v1136, 0
        %vm1153 = vcmp.ne.s32.totalorder %v1137, 0
        %v1154 = vsel %vm1138, -1e+09, %v983
        %v1155 = vsel %vm1139, -1e+09, %v986
        %v1156 = vsel %vm1140, -1e+09, %v989
        %v1157 = vsel %vm1141, -1e+09, %v992
        %v1158 = vsel %vm1142, -1e+09, %v995
        %v1159 = vsel %vm1143, -1e+09, %v998
        %v1160 = vsel %vm1144, -1e+09, %v1001
        %v1161 = vsel %vm1145, -1e+09, %v1004
        %v1162 = vsel %vm1146, -1e+09, %v1007
        %v1163 = vsel %vm1147, -1e+09, %v1010
        %v1164 = vsel %vm1148, -1e+09, %v1013
        %v1165 = vsel %vm1149, -1e+09, %v1016
        %v1166 = vsel %vm1150, -1e+09, %v1019
        %v1167 = vsel %vm1151, -1e+09, %v1022
        %v1168 = vsel %vm1152, -1e+09, %v1025
        %v1169 = vsel %vm1153, -1e+09, %v1028
        %1170 = vmax.xlane.f32.xlu0 %v1154
        %v1171 = vpop.xlane.xlu0 %1170
        %1172 = vmax.xlane.f32.xlu0 %v1155
        %v1173 = vpop.xlane.xlu0 %1172
        %1174 = vmax.xlane.f32.xlu0 %v1156
        %v1175 = vpop.xlane.xlu0 %1174
        %1176 = vmax.xlane.f32.xlu0 %v1157
        %v1177 = vpop.xlane.xlu0 %1176
        %1178 = vmax.xlane.f32.xlu0 %v1158
        %v1179 = vpop.xlane.xlu0 %1178
        %1180 = vmax.xlane.f32.xlu0 %v1159
        %v1181 = vpop.xlane.xlu0 %1180
        %1182 = vmax.xlane.f32.xlu0 %v1160
        %v1183 = vpop.xlane.xlu0 %1182
        %1184 = vmax.xlane.f32.xlu0 %v1161
        %v1185 = vpop.xlane.xlu0 %1184
        %1186 = vmax.xlane.f32.xlu0 %v1162
        %v1187 = vpop.xlane.xlu0 %1186
        %1188 = vmax.xlane.f32.xlu0 %v1163
        %v1189 = vpop.xlane.xlu0 %1188
        %1190 = vmax.xlane.f32.xlu0 %v1164
        %v1191 = vpop.xlane.xlu0 %1190
        %1192 = vmax.xlane.f32.xlu0 %v1165
        %v1193 = vpop.xlane.xlu0 %1192
        %1194 = vmax.xlane.f32.xlu0 %v1166
        %v1195 = vpop.xlane.xlu0 %1194
        %1196 = vmax.xlane.f32.xlu0 %v1167
        %v1197 = vpop.xlane.xlu0 %1196
        %1198 = vmax.xlane.f32.xlu0 %v1168
        %v1199 = vpop.xlane.xlu0 %1198
        %1200 = vmax.xlane.f32.xlu0 %v1169
        %v1201 = vpop.xlane.xlu0 %1200
        %v1202 = vmax.f32 %v710, %v1171
        %v1203 = vmax.f32 %v712, %v1173
        %v1204 = vmax.f32 %v714, %v1175
        %v1205 = vmax.f32 %v716, %v1177
        %v1206 = vmax.f32 %v718, %v1179
        %v1207 = vmax.f32 %v720, %v1181
        %v1208 = vmax.f32 %v722, %v1183
        %v1209 = vmax.f32 %v724, %v1185
        %v1210 = vmax.f32 %v726, %v1187
        %v1211 = vmax.f32 %v728, %v1189
        %v1212 = vmax.f32 %v730, %v1191
        %v1213 = vmax.f32 %v732, %v1193
        %v1214 = vmax.f32 %v734, %v1195
        %v1215 = vmax.f32 %v736, %v1197
        %v1216 = vmax.f32 %v738, %v1199
        %v1217 = vmax.f32 %v740, %v1201
        %v1218 = vsub.f32 %v710, %v1202
        %v1219 = vsub.f32 %v712, %v1203
        %v1220 = vsub.f32 %v714, %v1204
        %v1221 = vsub.f32 %v716, %v1205
        %v1222 = vsub.f32 %v718, %v1206
        %v1223 = vsub.f32 %v720, %v1207
        %v1224 = vsub.f32 %v722, %v1208
        %v1225 = vsub.f32 %v724, %v1209
        %v1226 = vsub.f32 %v726, %v1210
        %v1227 = vsub.f32 %v728, %v1211
        %v1228 = vsub.f32 %v730, %v1212
        %v1229 = vsub.f32 %v732, %v1213
        %v1230 = vsub.f32 %v734, %v1214
        %v1231 = vsub.f32 %v736, %v1215
        %v1232 = vsub.f32 %v738, %v1216
        %v1233 = vsub.f32 %v740, %v1217
        %v1234 = vmul.f32 %v1218, 1.442695
        %v1235 = vpow.pop %v1234
        %v1236 = vmul.f32 %v1219, 1.442695
        %v1237 = vpow.pop %v1236
        %v1238 = vmul.f32 %v1220, 1.442695
        %v1239 = vpow.pop %v1238
        %v1240 = vmul.f32 %v1221, 1.442695
        %v1241 = vpow.pop %v1240
        %v1242 = vmul.f32 %v1222, 1.442695
        %v1243 = vpow.pop %v1242
        %v1244 = vmul.f32 %v1223, 1.442695
        %v1245 = vpow.pop %v1244
        %v1246 = vmul.f32 %v1224, 1.442695
        %v1247 = vpow.pop %v1246
        %v1248 = vmul.f32 %v1225, 1.442695
        %v1249 = vpow.pop %v1248
        %v1250 = vmul.f32 %v1226, 1.442695
        %v1251 = vpow.pop %v1250
        %v1252 = vmul.f32 %v1227, 1.442695
        %v1253 = vpow.pop %v1252
        %v1254 = vmul.f32 %v1228, 1.442695
        %v1255 = vpow.pop %v1254
        %v1256 = vmul.f32 %v1229, 1.442695
        %v1257 = vpow.pop %v1256
        %v1258 = vmul.f32 %v1230, 1.442695
        %v1259 = vpow.pop %v1258
        %v1260 = vmul.f32 %v1231, 1.442695
        %v1261 = vpow.pop %v1260
        %v1262 = vmul.f32 %v1232, 1.442695
        %v1263 = vpow.pop %v1262
        %v1264 = vmul.f32 %v1233, 1.442695
        %v1265 = vpow.pop %v1264
        %v1266 = vmul.f32 %v885, %v1235
        %v1267 = vmul.f32 %v886, %v1237
        %v1268 = vmul.f32 %v887, %v1239
        %v1269 = vmul.f32 %v888, %v1241
        %v1270 = vmul.f32 %v889, %v1243
        %v1271 = vmul.f32 %v890, %v1245
        %v1272 = vmul.f32 %v891, %v1247
        %v1273 = vmul.f32 %v892, %v1249
        %v1274 = vmul.f32 %v893, %v1251
        %v1275 = vmul.f32 %v894, %v1253
        %v1276 = vmul.f32 %v895, %v1255
        %v1277 = vmul.f32 %v896, %v1257
        %v1278 = vmul.f32 %v897, %v1259
        %v1279 = vmul.f32 %v898, %v1261
        %v1280 = vmul.f32 %v899, %v1263
        %v1281 = vmul.f32 %v900, %v1265
        %v1282 = vsub.f32 %v1154, %v1202
        %v1283 = vsub.f32 %v1155, %v1203
        %v1284 = vsub.f32 %v1156, %v1204
        %v1285 = vsub.f32 %v1157, %v1205
        %v1286 = vsub.f32 %v1158, %v1206
        %v1287 = vsub.f32 %v1159, %v1207
        %v1288 = vsub.f32 %v1160, %v1208
        %v1289 = vsub.f32 %v1161, %v1209
        %v1290 = vsub.f32 %v1162, %v1210
        %v1291 = vsub.f32 %v1163, %v1211
        %v1292 = vsub.f32 %v1164, %v1212
        %v1293 = vsub.f32 %v1165, %v1213
        %v1294 = vsub.f32 %v1166, %v1214
        %v1295 = vsub.f32 %v1167, %v1215
        %v1296 = vsub.f32 %v1168, %v1216
        %v1297 = vsub.f32 %v1169, %v1217
        %v1298 = vmul.f32 %v1282, 1.442695
        %v1299 = vpow.pop %v1298
        %v1300 = vmul.f32 %v1283, 1.442695
        %v1301 = vpow.pop %v1300
        %v1302 = vmul.f32 %v1284, 1.442695
        %v1303 = vpow.pop %v1302
        %v1304 = vmul.f32 %v1285, 1.442695
        %v1305 = vpow.pop %v1304
        %v1306 = vmul.f32 %v1286, 1.442695
        %v1307 = vpow.pop %v1306
        %v1308 = vmul.f32 %v1287, 1.442695
        %v1309 = vpow.pop %v1308
        %v1310 = vmul.f32 %v1288, 1.442695
        %v1311 = vpow.pop %v1310
        %v1312 = vmul.f32 %v1289, 1.442695
        %v1313 = vpow.pop %v1312
        %v1314 = vmul.f32 %v1290, 1.442695
        %v1315 = vpow.pop %v1314
        %v1316 = vmul.f32 %v1291, 1.442695
        %v1317 = vpow.pop %v1316
        %v1318 = vmul.f32 %v1292, 1.442695
        %v1319 = vpow.pop %v1318
        %v1320 = vmul.f32 %v1293, 1.442695
        %v1321 = vpow.pop %v1320
        %v1322 = vmul.f32 %v1294, 1.442695
        %v1323 = vpow.pop %v1322
        %v1324 = vmul.f32 %v1295, 1.442695
        %v1325 = vpow.pop %v1324
        %v1326 = vmul.f32 %v1296, 1.442695
        %v1327 = vpow.pop %v1326
        %v1328 = vmul.f32 %v1297, 1.442695
        %v1329 = vpow.pop %v1328
        %1330 = vadd.xlane.f32.xlu0 %v1299
        %v1331 = vpop.xlane.xlu0 %1330
        %1332 = vadd.xlane.f32.xlu0 %v1301
        %v1333 = vpop.xlane.xlu0 %1332
        %1334 = vadd.xlane.f32.xlu0 %v1303
        %v1335 = vpop.xlane.xlu0 %1334
        %1336 = vadd.xlane.f32.xlu0 %v1305
        %v1337 = vpop.xlane.xlu0 %1336
        %1338 = vadd.xlane.f32.xlu0 %v1307
        %v1339 = vpop.xlane.xlu0 %1338
        %1340 = vadd.xlane.f32.xlu0 %v1309
        %v1341 = vpop.xlane.xlu0 %1340
        %1342 = vadd.xlane.f32.xlu0 %v1311
        %v1343 = vpop.xlane.xlu0 %1342
        %1344 = vadd.xlane.f32.xlu0 %v1313
        %v1345 = vpop.xlane.xlu0 %1344
        %1346 = vadd.xlane.f32.xlu0 %v1315
        %v1347 = vpop.xlane.xlu0 %1346
        %1348 = vadd.xlane.f32.xlu0 %v1317
        %v1349 = vpop.xlane.xlu0 %1348
        %1350 = vadd.xlane.f32.xlu0 %v1319
        %v1351 = vpop.xlane.xlu0 %1350
        %1352 = vadd.xlane.f32.xlu0 %v1321
        %v1353 = vpop.xlane.xlu0 %1352
        %1354 = vadd.xlane.f32.xlu0 %v1323
        %v1355 = vpop.xlane.xlu0 %1354
        %1356 = vadd.xlane.f32.xlu0 %v1325
        %v1357 = vpop.xlane.xlu0 %1356
        %1358 = vadd.xlane.f32.xlu0 %v1327
        %v1359 = vpop.xlane.xlu0 %1358
        %1360 = vadd.xlane.f32.xlu0 %v1329
        %v1361 = vpop.xlane.xlu0 %1360
        %v1362 = vadd.f32 %v1266, %v1331
        %v1363 = vadd.f32 %v1267, %v1333
        %v1364 = vadd.f32 %v1268, %v1335
        %v1365 = vadd.f32 %v1269, %v1337
        %v1366 = vadd.f32 %v1270, %v1339
        %v1367 = vadd.f32 %v1271, %v1341
        %v1368 = vadd.f32 %v1272, %v1343
        %v1369 = vadd.f32 %v1273, %v1345
        %v1370 = vadd.f32 %v1274, %v1347
        %v1371 = vadd.f32 %v1275, %v1349
        %v1372 = vadd.f32 %v1276, %v1351
        %v1373 = vadd.f32 %v1277, %v1353
        %v1374 = vadd.f32 %v1278, %v1355
        %v1375 = vadd.f32 %v1279, %v1357
        %v1376 = vadd.f32 %v1280, %v1359
        %v1377 = vadd.f32 %v1281, %v1361
        %v1378 = vrcp.pop %v1362
        %v1379 = vrcp.pop %v1363
        %v1380 = vrcp.pop %v1364
        %v1381 = vrcp.pop %v1365
        %v1382 = vrcp.pop %v1366
        %v1383 = vrcp.pop %v1367
        %v1384 = vrcp.pop %v1368
        %v1385 = vrcp.pop %v1369
        %v1386 = vrcp.pop %v1370
        %v1387 = vrcp.pop %v1371
        %v1388 = vrcp.pop %v1372
        %v1389 = vrcp.pop %v1373
        %v1390 = vrcp.pop %v1374
        %v1391 = vrcp.pop %v1375
        %v1392 = vrcp.pop %v1376
        %v1393 = vrcp.pop %v1377
        %v1394 = vsub.f32 %v693, %v1202
        %v1395 = vsub.f32 %v694, %v1203
        %v1396 = vsub.f32 %v695, %v1204
        %v1397 = vsub.f32 %v696, %v1205
        %v1398 = vsub.f32 %v697, %v1206
        %v1399 = vsub.f32 %v698, %v1207
        %v1400 = vsub.f32 %v699, %v1208
        %v1401 = vsub.f32 %v700, %v1209
        %v1402 = vsub.f32 %v701, %v1210
        %v1403 = vsub.f32 %v702, %v1211
        %v1404 = vsub.f32 %v703, %v1212
        %v1405 = vsub.f32 %v704, %v1213
        %v1406 = vsub.f32 %v705, %v1214
        %v1407 = vsub.f32 %v706, %v1215
        %v1408 = vsub.f32 %v707, %v1216
        %v1409 = vsub.f32 %v708, %v1217
        %v1410 = vmul.f32 %v1394, 1.442695
        %v1411 = vpow.pop %v1410
        %v1412 = vmul.f32 %v1395, 1.442695
        %v1413 = vpow.pop %v1412
        %v1414 = vmul.f32 %v1396, 1.442695
        %v1415 = vpow.pop %v1414
        %v1416 = vmul.f32 %v1397, 1.442695
        %v1417 = vpow.pop %v1416
        %v1418 = vmul.f32 %v1398, 1.442695
        %v1419 = vpow.pop %v1418
        %v1420 = vmul.f32 %v1399, 1.442695
        %v1421 = vpow.pop %v1420
        %v1422 = vmul.f32 %v1400, 1.442695
        %v1423 = vpow.pop %v1422
        %v1424 = vmul.f32 %v1401, 1.442695
        %v1425 = vpow.pop %v1424
        %v1426 = vmul.f32 %v1402, 1.442695
        %v1427 = vpow.pop %v1426
        %v1428 = vmul.f32 %v1403, 1.442695
        %v1429 = vpow.pop %v1428
        %v1430 = vmul.f32 %v1404, 1.442695
        %v1431 = vpow.pop %v1430
        %v1432 = vmul.f32 %v1405, 1.442695
        %v1433 = vpow.pop %v1432
        %v1434 = vmul.f32 %v1406, 1.442695
        %v1435 = vpow.pop %v1434
        %v1436 = vmul.f32 %v1407, 1.442695
        %v1437 = vpow.pop %v1436
        %v1438 = vmul.f32 %v1408, 1.442695
        %v1439 = vpow.pop %v1438
        %v1440 = vmul.f32 %v1409, 1.442695
        %v1441 = vpow.pop %v1440
        %v1442 = vmul.f32 %v1411, %v1378
        %v1443 = vmul.f32 %v1413, %v1379
        %v1444 = vmul.f32 %v1415, %v1380
        %v1445 = vmul.f32 %v1417, %v1381
        %v1446 = vmul.f32 %v1419, %v1382
        %v1447 = vmul.f32 %v1421, %v1383
        %v1448 = vmul.f32 %v1423, %v1384
        %v1449 = vmul.f32 %v1425, %v1385
        %v1450 = vmul.f32 %v1427, %v1386
        %v1451 = vmul.f32 %v1429, %v1387
        %v1452 = vmul.f32 %v1431, %v1388
        %v1453 = vmul.f32 %v1433, %v1389
        %v1454 = vmul.f32 %v1435, %v1390
        %v1455 = vmul.f32 %v1437, %v1391
        %v1456 = vmul.f32 %v1439, %v1392
        %v1457 = vmul.f32 %v1441, %v1393
        %1458 = vst [vmem:[%s314] sm:$0xff] %v1442
        %1459 = vst [vmem:[%s314 + $0x10] sm:$0xff] %v1443
        %1460 = vst [vmem:[%s314 + $0x20] sm:$0xff] %v1444
        %1461 = vst [vmem:[%s314 + $0x30] sm:$0xff] %v1445
        %1462 = vst [vmem:[%s314 + $0x40] sm:$0xff] %v1446
        %1463 = vst [vmem:[%s314 + $0x50] sm:$0xff] %v1447
        %1464 = vst [vmem:[%s314 + $0x60] sm:$0xff] %v1448
        %1465 = vst [vmem:[%s314 + $0x70] sm:$0xff] %v1449
        %1466 = vst [vmem:[%s314 + $0x80] sm:$0xff] %v1450
        %1467 = vst [vmem:[%s314 + $0x90] sm:$0xff] %v1451
        %1468 = vst [vmem:[%s314 + $0xa0] sm:$0xff] %v1452
        %1469 = vst [vmem:[%s314 + $0xb0] sm:$0xff] %v1453
        %1470 = vst [vmem:[%s314 + $0xc0] sm:$0xff] %v1454
        %1471 = vst [vmem:[%s314 + $0xd0] sm:$0xff] %v1455
        %1472 = vst [vmem:[%s314 + $0xe0] sm:$0xff] %v1456
        %1473 = vst [vmem:[%s314 + $0xf0] sm:$0xff] %v1457
        %v1474 = vld [vmem:[%s334] sm:$0xff]
        %v1475 = vld [vmem:[%s334 + $0x8] sm:$0xff]
        %v1476 = vld [vmem:[%s334 + $0x10] sm:$0xff]
        %v1477 = vld [vmem:[%s334 + $0x18] sm:$0xff]
        %v1478 = vld [vmem:[%s334 + $0x20] sm:$0xff]
        %v1479 = vld [vmem:[%s334 + $0x28] sm:$0xff]
        %v1480 = vld [vmem:[%s334 + $0x30] sm:$0xff]
        %v1481 = vld [vmem:[%s334 + $0x38] sm:$0xff]
        %v1482 = vld [vmem:[%s334 + $0x40] sm:$0xff]
        %v1483 = vld [vmem:[%s334 + $0x48] sm:$0xff]
        %v1484 = vld [vmem:[%s334 + $0x50] sm:$0xff]
        %v1485 = vld [vmem:[%s334 + $0x58] sm:$0xff]
        %v1486 = vld [vmem:[%s334 + $0x60] sm:$0xff]
        %v1487 = vld [vmem:[%s334 + $0x68] sm:$0xff]
        %v1488 = vld [vmem:[%s334 + $0x70] sm:$0xff]
        %v1489 = vld [vmem:[%s334 + $0x78] sm:$0xff]
        %v1490 = vld [vmem:[%s329 + $0x80] sm:$0xff]
        %v1491 = vld [vmem:[%s329 + $0x88] sm:$0xff]
        %v1492 = vld [vmem:[%s329 + $0x90] sm:$0xff]
        %v1493 = vld [vmem:[%s329 + $0x98] sm:$0xff]
        %v1494 = vld [vmem:[%s329 + $0xa0] sm:$0xff]
        %v1495 = vld [vmem:[%s329 + $0xa8] sm:$0xff]
        %v1496 = vld [vmem:[%s329 + $0xb0] sm:$0xff]
        %v1497 = vld [vmem:[%s329 + $0xb8] sm:$0xff]
        %v1498 = vld [vmem:[%s329 + $0xc0] sm:$0xff]
        %v1499 = vld [vmem:[%s329 + $0xc8] sm:$0xff]
        %v1500 = vld [vmem:[%s329 + $0xd0] sm:$0xff]
        %v1501 = vld [vmem:[%s329 + $0xd8] sm:$0xff]
        %v1502 = vld [vmem:[%s329 + $0xe0] sm:$0xff]
        %v1503 = vld [vmem:[%s329 + $0xe8] sm:$0xff]
        %v1504 = vld [vmem:[%s329 + $0xf0] sm:$0xff]
        %v1505 = vld [vmem:[%s329 + $0xf8] sm:$0xff]
        %v1507 = vsel %vm407, %v1490, 0
        %v1510 = vsel %vm407, %v1491, 0
        %v1513 = vsel %vm407, %v1492, 0
        %v1516 = vsel %vm407, %v1493, 0
        %v1519 = vsel %vm407, %v1494, 0
        %v1522 = vsel %vm407, %v1495, 0
        %v1525 = vsel %vm407, %v1496, 0
        %v1528 = vsel %vm407, %v1497, 0
        %v1531 = vsel %vm407, %v1498, 0
        %v1534 = vsel %vm407, %v1499, 0
        %v1537 = vsel %vm407, %v1500, 0
        %v1540 = vsel %vm407, %v1501, 0
        %v1543 = vsel %vm407, %v1502, 0
        %v1546 = vsel %vm407, %v1503, 0
        %v1549 = vsel %vm407, %v1504, 0
        %v1552 = vsel %vm407, %v1505, 0
        %1554 = vmatpush.xpose.msra.mxu0 %v1552
        %1555 = vmatpush.xpose.msra.mxu0 %v1549
        %1556 = vmatpush.xpose.msra.mxu0 %v1546
        %1557 = vmatpush.xpose.msra.mxu0 %v1543
        %1558 = vmatpush.xpose.msra.mxu0 %v1540
        %1559 = vmatpush.xpose.msra.mxu0 %v1537
        %1560 = vmatpush.xpose.msra.mxu0 %v1534
        %1561 = vmatpush.xpose.msra.mxu0 %v1531
        %1562 = vmatpush.xpose.msra.mxu0 %v1528
        %1563 = vmatpush.xpose.msra.mxu0 %v1525
        %1564 = vmatpush.xpose.msra.mxu0 %v1522
        %1565 = vmatpush.xpose.msra.mxu0 %v1519
        %1566 = vmatpush.xpose.msra.mxu0 %v1516
        %1567 = vmatpush.xpose.msra.mxu0 %v1513
        %1568 = vmatpush.xpose.msra.mxu0 %v1510
        %1569 = vmatpush.xpose.msra.mxu0 %v1507
        %1570 = vmatmul.f32.gmra.mxu0 %v409
        %v1571 = vpop.f32.mrf.mxu0
        %v1572 = vadd.f32 0.0, %v1571
        %1573 = vmatmul.f32.gmra.mxu0 %v412
        %v1574 = vpop.f32.mrf.mxu0
        %v1575 = vadd.f32 0.0, %v1574
        %1576 = vmatmul.f32.gmra.mxu0 %v415
        %v1577 = vpop.f32.mrf.mxu0
        %v1578 = vadd.f32 0.0, %v1577
        %1579 = vmatmul.f32.gmra.mxu0 %v418
        %v1580 = vpop.f32.mrf.mxu0
        %v1581 = vadd.f32 0.0, %v1580
        %1582 = vmatmul.f32.gmra.mxu0 %v421
        %v1583 = vpop.f32.mrf.mxu0
        %v1584 = vadd.f32 0.0, %v1583
        %1585 = vmatmul.f32.gmra.mxu0 %v424
        %v1586 = vpop.f32.mrf.mxu0
        %v1587 = vadd.f32 0.0, %v1586
        %1588 = vmatmul.f32.gmra.mxu0 %v427
        %v1589 = vpop.f32.mrf.mxu0
        %v1590 = vadd.f32 0.0, %v1589
        %1591 = vmatmul.f32.gmra.mxu0 %v430
        %v1592 = vpop.f32.mrf.mxu0
        %v1593 = vadd.f32 0.0, %v1592
        %1594 = vmatmul.f32.gmra.mxu0 %v433
        %v1595 = vpop.f32.mrf.mxu0
        %v1596 = vadd.f32 0.0, %v1595
        %1597 = vmatmul.f32.gmra.mxu0 %v436
        %v1598 = vpop.f32.mrf.mxu0
        %v1599 = vadd.f32 0.0, %v1598
        %1600 = vmatmul.f32.gmra.mxu0 %v439
        %v1601 = vpop.f32.mrf.mxu0
        %v1602 = vadd.f32 0.0, %v1601
        %1603 = vmatmul.f32.gmra.mxu0 %v442
        %v1604 = vpop.f32.mrf.mxu0
        %v1605 = vadd.f32 0.0, %v1604
        %1606 = vmatmul.f32.gmra.mxu0 %v445
        %v1607 = vpop.f32.mrf.mxu0
        %v1608 = vadd.f32 0.0, %v1607
        %1609 = vmatmul.f32.gmra.mxu0 %v448
        %v1610 = vpop.f32.mrf.mxu0
        %v1611 = vadd.f32 0.0, %v1610
        %1612 = vmatmul.f32.gmra.mxu0 %v451
        %v1613 = vpop.f32.mrf.mxu0
        %v1614 = vadd.f32 0.0, %v1613
        %1615 = vmatmul.f32.gmra.mxu0 %v454
        %v1616 = vpop.f32.mrf.mxu0
        %v1617 = vadd.f32 0.0, %v1616
        %1618 = vdwg.mxu0
        %v1619 = vld [vmem:[%s344 + $0x8] sm:$0xff]
        %v1620 = vld [vmem:[%s344 + $0x18] sm:$0xff]
        %v1621 = vld [vmem:[%s344 + $0x28] sm:$0xff]
        %v1622 = vld [vmem:[%s344 + $0x38] sm:$0xff]
        %vm1623 = vnez %v1619
        %vm1624 = vnez %v1620
        %vm1625 = vnez %v1621
        %vm1626 = vnez %v1622
        %v1627 = vsel %vm1623, 16843009, 0
        %v1628 = vsel %vm1624, 16843009, 0
        %v1629 = vsel %vm1625, 16843009, 0
        %v1630 = vsel %vm1626, 16843009, 0
        %v1631 = vunpack.c.0.s8 %v1627
        %v1632 = vunpack.c.1.s8 %v1627
        %v1633 = vunpack.c.2.s8 %v1627
        %v1634 = vunpack.c.3.s8 %v1627
        %v1635 = vunpack.c.0.s8 %v1628
        %v1636 = vunpack.c.1.s8 %v1628
        %v1637 = vunpack.c.2.s8 %v1628
        %v1638 = vunpack.c.3.s8 %v1628
        %v1639 = vunpack.c.0.s8 %v1629
        %v1640 = vunpack.c.1.s8 %v1629
        %v1641 = vunpack.c.2.s8 %v1629
        %v1642 = vunpack.c.3.s8 %v1629
        %v1643 = vunpack.c.0.s8 %v1630
        %v1644 = vunpack.c.1.s8 %v1630
        %v1645 = vunpack.c.2.s8 %v1630
        %v1646 = vunpack.c.3.s8 %v1630
        %v1647 = vpack.c.b16 %v1631, %v1631
        %v1648 = vpack.c.b8 %v1647, %v1647
        %v1649 = vpack.c.b16 %v1632, %v1632
        %v1650 = vpack.c.b8 %v1649, %v1649
        %v1651 = vpack.c.b16 %v1633, %v1633
        %v1652 = vpack.c.b8 %v1651, %v1651
        %v1653 = vpack.c.b16 %v1634, %v1634
        %v1654 = vpack.c.b8 %v1653, %v1653
        %v1655 = vpack.c.b16 %v1635, %v1635
        %v1656 = vpack.c.b8 %v1655, %v1655
        %v1657 = vpack.c.b16 %v1636, %v1636
        %v1658 = vpack.c.b8 %v1657, %v1657
        %v1659 = vpack.c.b16 %v1637, %v1637
        %v1660 = vpack.c.b8 %v1659, %v1659
        %v1661 = vpack.c.b16 %v1638, %v1638
        %v1662 = vpack.c.b8 %v1661, %v1661
        %v1663 = vpack.c.b16 %v1639, %v1639
        %v1664 = vpack.c.b8 %v1663, %v1663
        %v1665 = vpack.c.b16 %v1640, %v1640
        %v1666 = vpack.c.b8 %v1665, %v1665
        %v1667 = vpack.c.b16 %v1641, %v1641
        %v1668 = vpack.c.b8 %v1667, %v1667
        %v1669 = vpack.c.b16 %v1642, %v1642
        %v1670 = vpack.c.b8 %v1669, %v1669
        %v1671 = vpack.c.b16 %v1643, %v1643
        %v1672 = vpack.c.b8 %v1671, %v1671
        %v1673 = vpack.c.b16 %v1644, %v1644
        %v1674 = vpack.c.b8 %v1673, %v1673
        %v1675 = vpack.c.b16 %v1645, %v1645
        %v1676 = vpack.c.b8 %v1675, %v1675
        %v1677 = vpack.c.b16 %v1646, %v1646
        %v1678 = vpack.c.b8 %v1677, %v1677
        %vm1679 = vnez %v1648
        %vm1680 = vnez %v1650
        %vm1681 = vnez %v1652
        %vm1682 = vnez %v1654
        %vm1683 = vnez %v1656
        %vm1684 = vnez %v1658
        %vm1685 = vnez %v1660
        %vm1686 = vnez %v1662
        %vm1687 = vnez %v1664
        %vm1688 = vnez %v1666
        %vm1689 = vnez %v1668
        %vm1690 = vnez %v1670
        %vm1691 = vnez %v1672
        %vm1692 = vnez %v1674
        %vm1693 = vnez %v1676
        %vm1694 = vnez %v1678
        %v1695 = vsel %vm1679, 16843009, 0
        %v1696 = vsel %vm1680, 16843009, 0
        %v1697 = vsel %vm1681, 16843009, 0
        %v1698 = vsel %vm1682, 16843009, 0
        %v1699 = vsel %vm1683, 16843009, 0
        %v1700 = vsel %vm1684, 16843009, 0
        %v1701 = vsel %vm1685, 16843009, 0
        %v1702 = vsel %vm1686, 16843009, 0
        %v1703 = vsel %vm1687, 16843009, 0
        %v1704 = vsel %vm1688, 16843009, 0
        %v1705 = vsel %vm1689, 16843009, 0
        %v1706 = vsel %vm1690, 16843009, 0
        %v1707 = vsel %vm1691, 16843009, 0
        %v1708 = vsel %vm1692, 16843009, 0
        %v1709 = vsel %vm1693, 16843009, 0
        %v1710 = vsel %vm1694, 16843009, 0
        %v1711 = vunpack.c.0.s8 %v1695
        %v1712 = vunpack.c.0.s8 %v1696
        %v1713 = vunpack.c.0.s8 %v1697
        %v1714 = vunpack.c.0.s8 %v1698
        %v1715 = vunpack.c.0.s8 %v1699
        %v1716 = vunpack.c.0.s8 %v1700
        %v1717 = vunpack.c.0.s8 %v1701
        %v1718 = vunpack.c.0.s8 %v1702
        %v1719 = vunpack.c.0.s8 %v1703
        %v1720 = vunpack.c.0.s8 %v1704
        %v1721 = vunpack.c.0.s8 %v1705
        %v1722 = vunpack.c.0.s8 %v1706
        %v1723 = vunpack.c.0.s8 %v1707
        %v1724 = vunpack.c.0.s8 %v1708
        %v1725 = vunpack.c.0.s8 %v1709
        %v1726 = vunpack.c.0.s8 %v1710
        %vm1727 = vcmp.ne.s32.totalorder %v1711, 0
        %vm1728 = vcmp.ne.s32.totalorder %v1712, 0
        %vm1729 = vcmp.ne.s32.totalorder %v1713, 0
        %vm1730 = vcmp.ne.s32.totalorder %v1714, 0
        %vm1731 = vcmp.ne.s32.totalorder %v1715, 0
        %vm1732 = vcmp.ne.s32.totalorder %v1716, 0
        %vm1733 = vcmp.ne.s32.totalorder %v1717, 0
        %vm1734 = vcmp.ne.s32.totalorder %v1718, 0
        %vm1735 = vcmp.ne.s32.totalorder %v1719, 0
        %vm1736 = vcmp.ne.s32.totalorder %v1720, 0
        %vm1737 = vcmp.ne.s32.totalorder %v1721, 0
        %vm1738 = vcmp.ne.s32.totalorder %v1722, 0
        %vm1739 = vcmp.ne.s32.totalorder %v1723, 0
        %vm1740 = vcmp.ne.s32.totalorder %v1724, 0
        %vm1741 = vcmp.ne.s32.totalorder %v1725, 0
        %vm1742 = vcmp.ne.s32.totalorder %v1726, 0
        %v1743 = vsel %vm1727, -1e+09, %v1572
        %v1744 = vsel %vm1728, -1e+09, %v1575
        %v1745 = vsel %vm1729, -1e+09, %v1578
        %v1746 = vsel %vm1730, -1e+09, %v1581
        %v1747 = vsel %vm1731, -1e+09, %v1584
        %v1748 = vsel %vm1732, -1e+09, %v1587
        %v1749 = vsel %vm1733, -1e+09, %v1590
        %v1750 = vsel %vm1734, -1e+09, %v1593
        %v1751 = vsel %vm1735, -1e+09, %v1596
        %v1752 = vsel %vm1736, -1e+09, %v1599
        %v1753 = vsel %vm1737, -1e+09, %v1602
        %v1754 = vsel %vm1738, -1e+09, %v1605
        %v1755 = vsel %vm1739, -1e+09, %v1608
        %v1756 = vsel %vm1740, -1e+09, %v1611
        %v1757 = vsel %vm1741, -1e+09, %v1614
        %v1758 = vsel %vm1742, -1e+09, %v1617
        %v1759 = vsub.f32 %v1743, %v1202
        %v1760 = vsub.f32 %v1744, %v1203
        %v1761 = vsub.f32 %v1745, %v1204
        %v1762 = vsub.f32 %v1746, %v1205
        %v1763 = vsub.f32 %v1747, %v1206
        %v1764 = vsub.f32 %v1748, %v1207
        %v1765 = vsub.f32 %v1749, %v1208
        %v1766 = vsub.f32 %v1750, %v1209
        %v1767 = vsub.f32 %v1751, %v1210
        %v1768 = vsub.f32 %v1752, %v1211
        %v1769 = vsub.f32 %v1753, %v1212
        %v1770 = vsub.f32 %v1754, %v1213
        %v1771 = vsub.f32 %v1755, %v1214
        %v1772 = vsub.f32 %v1756, %v1215
        %v1773 = vsub.f32 %v1757, %v1216
        %v1774 = vsub.f32 %v1758, %v1217
        %v1775 = vmul.f32 %v1759, 1.442695
        %v1776 = vpow.pop %v1775
        %v1777 = vmul.f32 %v1760, 1.442695
        %v1778 = vpow.pop %v1777
        %v1779 = vmul.f32 %v1761, 1.442695
        %v1780 = vpow.pop %v1779
        %v1781 = vmul.f32 %v1762, 1.442695
        %v1782 = vpow.pop %v1781
        %v1783 = vmul.f32 %v1763, 1.442695
        %v1784 = vpow.pop %v1783
        %v1785 = vmul.f32 %v1764, 1.442695
        %v1786 = vpow.pop %v1785
        %v1787 = vmul.f32 %v1765, 1.442695
        %v1788 = vpow.pop %v1787
        %v1789 = vmul.f32 %v1766, 1.442695
        %v1790 = vpow.pop %v1789
        %v1791 = vmul.f32 %v1767, 1.442695
        %v1792 = vpow.pop %v1791
        %v1793 = vmul.f32 %v1768, 1.442695
        %v1794 = vpow.pop %v1793
        %v1795 = vmul.f32 %v1769, 1.442695
        %v1796 = vpow.pop %v1795
        %v1797 = vmul.f32 %v1770, 1.442695
        %v1798 = vpow.pop %v1797
        %v1799 = vmul.f32 %v1771, 1.442695
        %v1800 = vpow.pop %v1799
        %v1801 = vmul.f32 %v1772, 1.442695
        %v1802 = vpow.pop %v1801
        %v1803 = vmul.f32 %v1773, 1.442695
        %v1804 = vpow.pop %v1803
        %v1805 = vmul.f32 %v1774, 1.442695
        %v1806 = vpow.pop %v1805
        %v1807 = vmul.f32 %v1776, %v1378
        %v1808 = vmul.f32 %v1778, %v1379
        %v1809 = vmul.f32 %v1780, %v1380
        %v1810 = vmul.f32 %v1782, %v1381
        %v1811 = vmul.f32 %v1784, %v1382
        %v1812 = vmul.f32 %v1786, %v1383
        %v1813 = vmul.f32 %v1788, %v1384
        %v1814 = vmul.f32 %v1790, %v1385
        %v1815 = vmul.f32 %v1792, %v1386
        %v1816 = vmul.f32 %v1794, %v1387
        %v1817 = vmul.f32 %v1796, %v1388
        %v1818 = vmul.f32 %v1798, %v1389
        %v1819 = vmul.f32 %v1800, %v1390
        %v1820 = vmul.f32 %v1802, %v1391
        %v1821 = vmul.f32 %v1804, %v1392
        %v1822 = vmul.f32 %v1806, %v1393
        %1823 = vst [vmem:[%s314 + $0x8] sm:$0xff] %v1807
        %1824 = vst [vmem:[%s314 + $0x18] sm:$0xff] %v1808
        %1825 = vst [vmem:[%s314 + $0x28] sm:$0xff] %v1809
        %1826 = vst [vmem:[%s314 + $0x38] sm:$0xff] %v1810
        %1827 = vst [vmem:[%s314 + $0x48] sm:$0xff] %v1811
        %1828 = vst [vmem:[%s314 + $0x58] sm:$0xff] %v1812
        %1829 = vst [vmem:[%s314 + $0x68] sm:$0xff] %v1813
        %1830 = vst [vmem:[%s314 + $0x78] sm:$0xff] %v1814
        %1831 = vst [vmem:[%s314 + $0x88] sm:$0xff] %v1815
        %1832 = vst [vmem:[%s314 + $0x98] sm:$0xff] %v1816
        %1833 = vst [vmem:[%s314 + $0xa8] sm:$0xff] %v1817
        %1834 = vst [vmem:[%s314 + $0xb8] sm:$0xff] %v1818
        %1835 = vst [vmem:[%s314 + $0xc8] sm:$0xff] %v1819
        %1836 = vst [vmem:[%s314 + $0xd8] sm:$0xff] %v1820
        %1837 = vst [vmem:[%s314 + $0xe8] sm:$0xff] %v1821
        %1838 = vst [vmem:[%s314 + $0xf8] sm:$0xff] %v1822
        %v1839 = vld [vmem:[%s334 + $0x80] sm:$0xff]
        %v1840 = vld [vmem:[%s334 + $0x88] sm:$0xff]
        %v1841 = vld [vmem:[%s334 + $0x90] sm:$0xff]
        %v1842 = vld [vmem:[%s334 + $0x98] sm:$0xff]
        %v1843 = vld [vmem:[%s334 + $0xa0] sm:$0xff]
        %v1844 = vld [vmem:[%s334 + $0xa8] sm:$0xff]
        %v1845 = vld [vmem:[%s334 + $0xb0] sm:$0xff]
        %v1846 = vld [vmem:[%s334 + $0xb8] sm:$0xff]
        %v1847 = vld [vmem:[%s334 + $0xc0] sm:$0xff]
        %v1848 = vld [vmem:[%s334 + $0xc8] sm:$0xff]
        %v1849 = vld [vmem:[%s334 + $0xd0] sm:$0xff]
        %v1850 = vld [vmem:[%s334 + $0xd8] sm:$0xff]
        %v1851 = vld [vmem:[%s334 + $0xe0] sm:$0xff]
        %v1852 = vld [vmem:[%s334 + $0xe8] sm:$0xff]
        %v1853 = vld [vmem:[%s334 + $0xf0] sm:$0xff]
        %v1854 = vld [vmem:[%s334 + $0xf8] sm:$0xff]
        %1855 = vmatpush.msra.mxu0 %v1854
        %1856 = vmatpush.msra.mxu0 %v1853
        %1857 = vmatpush.msra.mxu0 %v1852
        %1858 = vmatpush.msra.mxu0 %v1851
        %1859 = vmatpush.msra.mxu0 %v1850
        %1860 = vmatpush.msra.mxu0 %v1849
        %1861 = vmatpush.msra.mxu0 %v1848
        %1862 = vmatpush.msra.mxu0 %v1847
        %1863 = vmatpush.msra.mxu0 %v1846
        %1864 = vmatpush.msra.mxu0 %v1845
        %1865 = vmatpush.msra.mxu0 %v1844
        %1866 = vmatpush.msra.mxu0 %v1843
        %1867 = vmatpush.msra.mxu0 %v1842
        %1868 = vmatpush.msra.mxu0 %v1841
        %1869 = vmatpush.msra.mxu0 %v1840
        %1870 = vmatpush.msra.mxu0 %v1839
        %1871 = vmatmul.f32.gmra.mxu0 %v1807
        %v1872 = vpop.f32.mrf.mxu0
        %v1873 = vadd.f32 0.0, %v1872
        %1874 = vmatmul.f32.gmra.mxu0 %v1808
        %v1875 = vpop.f32.mrf.mxu0
        %v1876 = vadd.f32 0.0, %v1875
        %1877 = vmatmul.f32.gmra.mxu0 %v1809
        %v1878 = vpop.f32.mrf.mxu0
        %v1879 = vadd.f32 0.0, %v1878
        %1880 = vmatmul.f32.gmra.mxu0 %v1810
        %v1881 = vpop.f32.mrf.mxu0
        %v1882 = vadd.f32 0.0, %v1881
        %1883 = vmatmul.f32.gmra.mxu0 %v1811
        %v1884 = vpop.f32.mrf.mxu0
        %v1885 = vadd.f32 0.0, %v1884
        %1886 = vmatmul.f32.gmra.mxu0 %v1812
        %v1887 = vpop.f32.mrf.mxu0
        %v1888 = vadd.f32 0.0, %v1887
        %1889 = vmatmul.f32.gmra.mxu0 %v1813
        %v1890 = vpop.f32.mrf.mxu0
        %v1891 = vadd.f32 0.0, %v1890
        %1892 = vmatmul.f32.gmra.mxu0 %v1814
        %v1893 = vpop.f32.mrf.mxu0
        %v1894 = vadd.f32 0.0, %v1893
        %1895 = vmatmul.f32.gmra.mxu0 %v1815
        %v1896 = vpop.f32.mrf.mxu0
        %v1897 = vadd.f32 0.0, %v1896
        %1898 = vmatmul.f32.gmra.mxu0 %v1816
        %v1899 = vpop.f32.mrf.mxu0
        %v1900 = vadd.f32 0.0, %v1899
        %1901 = vmatmul.f32.gmra.mxu0 %v1817
        %v1902 = vpop.f32.mrf.mxu0
        %v1903 = vadd.f32 0.0, %v1902
        %1904 = vmatmul.f32.gmra.mxu0 %v1818
        %v1905 = vpop.f32.mrf.mxu0
        %v1906 = vadd.f32 0.0, %v1905
        %1907 = vmatmul.f32.gmra.mxu0 %v1819
        %v1908 = vpop.f32.mrf.mxu0
        %v1909 = vadd.f32 0.0, %v1908
        %1910 = vmatmul.f32.gmra.mxu0 %v1820
        %v1911 = vpop.f32.mrf.mxu0
        %v1912 = vadd.f32 0.0, %v1911
        %1913 = vmatmul.f32.gmra.mxu0 %v1821
        %v1914 = vpop.f32.mrf.mxu0
        %v1915 = vadd.f32 0.0, %v1914
        %1916 = vmatmul.f32.gmra.mxu0 %v1822
        %v1917 = vpop.f32.mrf.mxu0
        %v1918 = vadd.f32 0.0, %v1917
        %1919 = vdwg.mxu0
        %1920 = vmatpush.msra.mxu0 %v1489
        %1921 = vmatpush.msra.mxu0 %v1488
        %1922 = vmatpush.msra.mxu0 %v1487
        %1923 = vmatpush.msra.mxu0 %v1486
        %1924 = vmatpush.msra.mxu0 %v1485
        %1925 = vmatpush.msra.mxu0 %v1484
        %1926 = vmatpush.msra.mxu0 %v1483
        %1927 = vmatpush.msra.mxu0 %v1482
        %1928 = vmatpush.msra.mxu0 %v1481
        %1929 = vmatpush.msra.mxu0 %v1480
        %1930 = vmatpush.msra.mxu0 %v1479
        %1931 = vmatpush.msra.mxu0 %v1478
        %1932 = vmatpush.msra.mxu0 %v1477
        %1933 = vmatpush.msra.mxu0 %v1476
        %1934 = vmatpush.msra.mxu0 %v1475
        %1935 = vmatpush.msra.mxu0 %v1474
        %1936 = vmatmul.f32.gmra.mxu0 %v1442
        %v1937 = vpop.f32.mrf.mxu0
        %v1938 = vadd.f32 %v1873, %v1937
        %1939 = vmatmul.f32.gmra.mxu0 %v1443
        %v1940 = vpop.f32.mrf.mxu0
        %v1941 = vadd.f32 %v1876, %v1940
        %1942 = vmatmul.f32.gmra.mxu0 %v1444
        %v1943 = vpop.f32.mrf.mxu0
        %v1944 = vadd.f32 %v1879, %v1943
        %1945 = vmatmul.f32.gmra.mxu0 %v1445
        %v1946 = vpop.f32.mrf.mxu0
        %v1947 = vadd.f32 %v1882, %v1946
        %1948 = vmatmul.f32.gmra.mxu0 %v1446
        %v1949 = vpop.f32.mrf.mxu0
        %v1950 = vadd.f32 %v1885, %v1949
        %1951 = vmatmul.f32.gmra.mxu0 %v1447
        %v1952 = vpop.f32.mrf.mxu0
        %v1953 = vadd.f32 %v1888, %v1952
        %1954 = vmatmul.f32.gmra.mxu0 %v1448
        %v1955 = vpop.f32.mrf.mxu0
        %v1956 = vadd.f32 %v1891, %v1955
        %1957 = vmatmul.f32.gmra.mxu0 %v1449
        %v1958 = vpop.f32.mrf.mxu0
        %v1959 = vadd.f32 %v1894, %v1958
        %1960 = vmatmul.f32.gmra.mxu0 %v1450
        %v1961 = vpop.f32.mrf.mxu0
        %v1962 = vadd.f32 %v1897, %v1961
        %1963 = vmatmul.f32.gmra.mxu0 %v1451
        %v1964 = vpop.f32.mrf.mxu0
        %v1965 = vadd.f32 %v1900, %v1964
        %1966 = vmatmul.f32.gmra.mxu0 %v1452
        %v1967 = vpop.f32.mrf.mxu0
        %v1968 = vadd.f32 %v1903, %v1967
        %1969 = vmatmul.f32.gmra.mxu0 %v1453
        %v1970 = vpop.f32.mrf.mxu0
        %v1971 = vadd.f32 %v1906, %v1970
        %1972 = vmatmul.f32.gmra.mxu0 %v1454
        %v1973 = vpop.f32.mrf.mxu0
        %v1974 = vadd.f32 %v1909, %v1973
        %1975 = vmatmul.f32.gmra.mxu0 %v1455
        %v1976 = vpop.f32.mrf.mxu0
        %v1977 = vadd.f32 %v1912, %v1976
        %1978 = vmatmul.f32.gmra.mxu0 %v1456
        %v1979 = vpop.f32.mrf.mxu0
        %v1980 = vadd.f32 %v1915, %v1979
        %1981 = vmatmul.f32.gmra.mxu0 %v1457
        %v1982 = vpop.f32.mrf.mxu0
        %v1983 = vadd.f32 %v1918, %v1982
        %1984 = vdwg.mxu0
        %1985 = vst.msk [vmem:[%s354] sm:$0xff] %vm407, %v1938
        %1986 = vst.msk [vmem:[%s354 + $0x8] sm:$0xff] %vm407, %v1941
        %1987 = vst.msk [vmem:[%s354 + $0x10] sm:$0xff] %vm407, %v1944
        %1988 = vst.msk [vmem:[%s354 + $0x18] sm:$0xff] %vm407, %v1947
        %1989 = vst.msk [vmem:[%s354 + $0x20] sm:$0xff] %vm407, %v1950
        %1990 = vst.msk [vmem:[%s354 + $0x28] sm:$0xff] %vm407, %v1953
        %1991 = vst.msk [vmem:[%s354 + $0x30] sm:$0xff] %vm407, %v1956
        %1992 = vst.msk [vmem:[%s354 + $0x38] sm:$0xff] %vm407, %v1959
        %1993 = vst.msk [vmem:[%s354 + $0x40] sm:$0xff] %vm407, %v1962
        %1994 = vst.msk [vmem:[%s354 + $0x48] sm:$0xff] %vm407, %v1965
        %1995 = vst.msk [vmem:[%s354 + $0x50] sm:$0xff] %vm407, %v1968
        %1996 = vst.msk [vmem:[%s354 + $0x58] sm:$0xff] %vm407, %v1971
        %1997 = vst.msk [vmem:[%s354 + $0x60] sm:$0xff] %vm407, %v1974
        %1998 = vst.msk [vmem:[%s354 + $0x68] sm:$0xff] %vm407, %v1977
        %1999 = vst.msk [vmem:[%s354 + $0x70] sm:$0xff] %vm407, %v1980
        %2000 = vst.msk [vmem:[%s354 + $0x78] sm:$0xff] %vm407, %v1983
        %s2001 = smul.u32 16, %s25
        %p2002 = scmp.lt.s32.totalorder %s24, 3
        %s2003 = scalar_select %p2002, %s24, 3
        %p2004 = scmp.lt.s32.totalorder %s2001, 31
        %s2005 = scalar_select %p2004, %s2001, 31
        %s2006 = smul.addr %s2003, 32
        %s2007 = sadd.s32 %s2005, %s2006
        %s2008 = smul.addr %s2007, 8
        %s2009 = scalar_lea.vmem %s4, %s2008
        %s2010 = sand.u32 %s178, 1
        %s2011 = scalar_lea.sflag [#allocation3], %s2010
        %s2012 = sand.u32 %s178, 1
        %s2013 = smul.addr %s2012, 256
        %s2014 = scalar_lea.vmem [#allocation2], %s2013
        // Predicated region
        $region37: #{tpu_custom_call.1} parent=35 // pred_check
          %p2015 = pneg %p160
        $region38: #{tpu_custom_call.1} parent=35 // pred_check_branch
          %2017 = sbr.rel (%p2015) target = $region40
        $region39: #{tpu_custom_call.1} parent=35 // pred_region
          %s2018 = smul.u32 16, %s25
        $region40: #{tpu_custom_call.1} parent=35 // pred_fallthru
          _
        // Predicated region
        $region41: #{tpu_custom_call.1} parent=35 // pred_check
          %p2019 = pneg %p188
        $region42: #{tpu_custom_call.1} parent=35 // pred_check_branch
          %2021 = sbr.rel (%p2019) target = $region44
        $region43: #{tpu_custom_call.1} parent=35 // pred_region
          %s2022 = smul.u32 16, %s25
          %2024 = vsyncadd %s2011, 0
          %s2025 = smul.addr %s2022, 2
          %s2026 = smul.addr %s24, 64
          %s2027 = sadd.s32 %s2025, %s2026
          %s2028 = smul.addr %s2027, 8
          %s2029 = scalar_lea.hbm %s5, %s2028
          %s2030 = sshll.u32 %s2014, 4
          %s2031 = int_to_ptr.vmem [resolvable:$true] %s2030
          %s2032 = sshll.u32 %s2029, 4
          %s2033 = int_to_ptr.hbm [resolvable:$true] %s2032
          %2038 = dma.vmem_to_hbm [thread:$0]  %s2031, 4096, %s2033, %s2011, 256, 256, 16
        $region44: #{tpu_custom_call.1} parent=35 // pred_fallthru
          _
      $region36: #{tpu_custom_call.1} parent=5 // pred_fallthru
        _
      %p2039 = scmp.le.s32.totalorder 2, %s15
      // Predicated region
      $region45: #{tpu_custom_call.1} parent=5 // pred_check
        %p2040 = pneg %p2039
      $region46: #{tpu_custom_call.1} parent=5 // pred_check_branch
        %2042 = sbr.rel (%p2040) target = $region48
      $region47: #{tpu_custom_call.1} parent=5 // pred_region
        %s2043 = ssub.s32 %s15, 2
        // Predicated region
        $region49: #{tpu_custom_call.1} parent=47 // pred_check
          %p2044 = pneg %p166
        $region50: #{tpu_custom_call.1} parent=47 // pred_check_branch
          %2046 = sbr.rel (%p2044) target = $region52
        $region51: #{tpu_custom_call.1} parent=47 // pred_region
          %s2047 = smul.u32 16, %s27
          %p2048 = scmp.lt.s32.totalorder %s26, 3
          %s2049 = scalar_select %p2048, %s26, 3
          %p2050 = scmp.lt.s32.totalorder %s2047, 31
          %s2051 = scalar_select %p2050, %s2047, 31
          %s2052 = smul.addr %s2049, 32
          %s2053 = sadd.s32 %s2051, %s2052
          %s2054 = smul.addr %s2053, 8
          %s2055 = scalar_lea.vmem %s4, %s2054
        $region52: #{tpu_custom_call.1} parent=47 // pred_fallthru
          _
        // Predicated region
        $region53: #{tpu_custom_call.1} parent=47 // pred_check
          %p2056 = pneg %p194
        $region54: #{tpu_custom_call.1} parent=47 // pred_check_branch
          %2058 = sbr.rel (%p2056) target = $region56
        $region55: #{tpu_custom_call.1} parent=47 // pred_region
          %s2059 = sand.u32 %s179, 1
          %s2060 = scalar_lea.sflag [#allocation3], %s2059
          %s2061 = sand.u32 %s179, 1
          %s2062 = smul.addr %s2061, 256
          %s2063 = scalar_lea.vmem [#allocation2], %s2062
          %2065 = dma.done %s2060, 4096
        $region56: #{tpu_custom_call.1} parent=47 // pred_fallthru
          _
      $region48: #{tpu_custom_call.1} parent=5 // pred_fallthru
        _
    $region6: #{tpu_custom_call.1} parent=1 // loop_footer
      %s19 = sadd.s32 1, %s15
    $region7: #{tpu_custom_call.1} parent=1 // loop_footer_branch
      %14 = sbr.rel target = $region3
    $region8: #{tpu_custom_call.1} parent=1 // loop_exit
      _
    %2066 = vsyncpa [#allocation3], 1
    %s2067 = scalar_lea.sflag [#allocation3], 1
    %2068 = vsyncpa %s2067, 1

</llo_original>
